<compile_context>
chip_gen: v7x
topology: tpu7x:2x2x1
jax: 0.10.0
libtpu: 0.0.40
codegen_flags: <defaults>
</compile_context>

<pallas_src>
import functools

import jax
import jax.numpy as jnp
from jax.experimental import pallas as pl
from jax.experimental.pallas import tpu as pltpu


# ---------------------------------------------------------------------------
# Hardware-aware sizing helpers
# ---------------------------------------------------------------------------
def _tpu_vmem_capacity():
    try:
        info = pltpu.get_tpu_info()
        cap = getattr(info, "vmem_capacity_bytes", None)
        if cap:
            return int(cap)
    except Exception:
        pass
    return 64 << 20  # conservative (v7x-sized) fallback


def _vmem_budget():
    cap = _tpu_vmem_capacity()
    # Per-buffer budget for a streamed row tile: big tiles on 128 MiB parts
    # (amortize per-step overhead), smaller on 64 MiB parts (v7x headroom).
    tile_budget = (14 << 20) if cap >= (100 << 20) else (5 << 20)
    return cap, tile_budget


def _round_up(x, m):
    return ((x + m - 1) // m) * m


def _pick_tile(rows, width, dtype_bytes, budget):
    """Row-tile size: multiple of 8, fits the per-buffer byte budget, keeps
    >= 2 grid steps (pipelined streaming) when the matrix is big enough."""
    if rows <= 8:
        return rows
    max_rows = max(8, budget // max(1, width * dtype_bytes))
    tile = min(rows, 1024, max_rows)
    if tile >= rows:
        tile = _round_up(-(-rows // 2), 8)  # ceil(rows/2), mult of 8
    tile = max(8, (tile // 8) * 8)
    return min(tile, rows)


def _vmem_limit(resident_bytes, per_step_bytes, cap, buffers=2):
    est = int(1.5 * (resident_bytes + buffers * per_step_bytes)) + (4 << 20)
    return max(16 << 20, min(est, int(0.8 * cap)))


# ---------------------------------------------------------------------------
# GCN_s, streamed path:  one hop = tanh(S_tile @ (u@W1) + (u@W2)_tile)
# ---------------------------------------------------------------------------
def _gcn_s_hop_kernel(s_ref, uw1_ref, uw2_ref, out_ref, *, cdt):
    s = s_ref[...]
    if s.dtype != cdt:
        s = s.astype(cdt)                               # per-tile cast, hidden under DMA
    h = jnp.dot(s, uw1_ref[...], preferred_element_type=jnp.float32)
    h = h + uw2_ref[...].astype(jnp.float32)
    out_ref[...] = jnp.tanh(h).astype(out_ref.dtype)


def _gcn_s_hop(S, uW1, uW2, *, tile_budget, cap):
    n_users, hidden = uW1.shape
    dsize = S.dtype.itemsize
    tile = _pick_tile(n_users, n_users, dsize, tile_budget)
    grid = (pl.cdiv(n_users, tile),)
    resident = uW1.nbytes
    per_step = tile * n_users * dsize + tile * hidden * (uW2.dtype.itemsize + 4)
    cost = pl.CostEstimate(
        flops=2 * n_users * n_users * hidden,
        transcendentals=n_users * hidden,
        bytes_accessed=S.nbytes + uW1.nbytes + uW2.nbytes + n_users * hidden * 4,
    )
    return pl.pallas_call(
        functools.partial(_gcn_s_hop_kernel, cdt=uW1.dtype),
        grid=grid,
        in_specs=[
            pl.BlockSpec((tile, n_users), lambda i: (i, 0)),     # S row tile (streamed, stored dtype)
            pl.BlockSpec((n_users, hidden), lambda i: (0, 0)),   # u @ W1 (VMEM-resident)
            pl.BlockSpec((tile, hidden), lambda i: (i, 0)),      # (u @ W2) row tile (f32)
        ],
        out_specs=pl.BlockSpec((tile, hidden), lambda i: (i, 0)),
        out_shape=jax.ShapeDtypeStruct((n_users, hidden), jnp.float32),
        compiler_params=pltpu.CompilerParams(
            dimension_semantics=("parallel",),
            vmem_limit_bytes=_vmem_limit(resident, per_step, cap)),
        cost_estimate=cost,
    )(S, uW1, uW2)


# ---------------------------------------------------------------------------
# GCN_s, VMEM-resident path: S read from HBM once, all hops inside one call.
# ---------------------------------------------------------------------------
def _gcn_s_resident_kernel(s_ref, u0_ref, w1_ref, w2_ref, out_ref, *, hop):
    s = s_ref[...]
    u = u0_ref[...].astype(jnp.float32)
    for k in range(hop):                                  # hop is small & static
        uw1 = jnp.dot(u, w1_ref[k], preferred_element_type=jnp.float32)
        uw2 = jnp.dot(u, w2_ref[k], preferred_element_type=jnp.float32)
        h = jnp.dot(s, uw1.astype(s.dtype), preferred_element_type=jnp.float32) + uw2
        u = jnp.tanh(h)
        # TODO(synk): F.dropout between hops skipped (eval / training=False).
    out_ref[...] = u.astype(out_ref.dtype)


def _gcn_s_resident(S, u0, W1, W2, *, cap):
    n_users, hidden = u0.shape
    hop = W1.shape[0]
    cost = pl.CostEstimate(
        flops=hop * (2 * n_users * n_users * hidden + 4 * n_users * hidden * hidden),
        transcendentals=hop * n_users * hidden,
        bytes_accessed=S.nbytes + 2 * u0.nbytes + W1.nbytes + W2.nbytes,
    )
    est = int(2.5 * S.nbytes) + 8 * u0.nbytes + 2 * (W1.nbytes + W2.nbytes) + (4 << 20)
    vmem = max(16 << 20, min(est, int(0.9 * cap)))
    return pl.pallas_call(
        functools.partial(_gcn_s_resident_kernel, hop=hop),
        grid=(1,),
        in_specs=[
            pl.BlockSpec((n_users, n_users), lambda i: (0, 0)),     # S (resident, stored dtype)
            pl.BlockSpec((n_users, hidden), lambda i: (0, 0)),      # layer-0 user embeds (f32)
            pl.BlockSpec((hop, hidden, hidden), lambda i: (0, 0, 0)),  # W_k[:hidden]
            pl.BlockSpec((hop, hidden, hidden), lambda i: (0, 0, 0)),  # W_k[hidden:]
        ],
        out_specs=pl.BlockSpec((n_users, hidden), lambda i: (0, 0)),
        out_shape=jax.ShapeDtypeStruct((n_users, hidden), jnp.float32),
        compiler_params=pltpu.CompilerParams(
            dimension_semantics=("arbitrary",), vmem_limit_bytes=vmem),
        cost_estimate=cost,
    )(S, u0, W1, W2)


# ---------------------------------------------------------------------------
# GCN_a (LightGCN mean of 2 layers), ONE call over row tiles of the full A.
#   out = 0.5 * (all_emb + A @ all_emb)      -- the 0.5*u_s combine for the
#   user rows is a tiny wrapper op on the (n_users, hidden) result.
# ---------------------------------------------------------------------------
def _gcn_a_kernel(a_ref, all_c_ref, all_f_ref, out_ref, *, cdt):
    a = a_ref[...]
    if a.dtype != cdt:
        a = a.astype(cdt)                                 # per-tile cast, hidden under DMA
    prop = jnp.dot(a, all_c_ref[...], preferred_element_type=jnp.float32)
    out_ref[...] = (0.5 * (all_f_ref[...].astype(jnp.float32) + prop)).astype(out_ref.dtype)


def _gcn_a(A, all_emb_c, all_emb_f, *, tile_budget, cap):
    n_all, hidden = all_emb_c.shape
    dsize = A.dtype.itemsize
    tile = _pick_tile(n_all, n_all, dsize, tile_budget)
    grid = (pl.cdiv(n_all, tile),)
    resident = all_emb_c.nbytes
    per_step = tile * n_all * dsize + tile * hidden * (all_emb_f.dtype.itemsize + 4)
    cost = pl.CostEstimate(
        flops=2 * n_all * n_all * hidden,
        transcendentals=0,
        bytes_accessed=A.nbytes + all_emb_c.nbytes + all_emb_f.nbytes + n_all * hidden * 4,
    )
    return pl.pallas_call(
        functools.partial(_gcn_a_kernel, cdt=all_emb_c.dtype),
        grid=grid,
        in_specs=[
            pl.BlockSpec((tile, n_all), lambda i: (i, 0)),        # A row tile (streamed, stored dtype)
            pl.BlockSpec((n_all, hidden), lambda i: (0, 0)),      # all_emb (resident, compute dtype)
            pl.BlockSpec((tile, hidden), lambda i: (i, 0)),       # layer-0 row tile (f32)
        ],
        out_specs=pl.BlockSpec((tile, hidden), lambda i: (i, 0)),
        out_shape=jax.ShapeDtypeStruct((n_all, hidden), jnp.float32),
        compiler_params=pltpu.CompilerParams(
            dimension_semantics=("parallel",),
            vmem_limit_bytes=_vmem_limit(resident, per_step, cap)),
        cost_estimate=cost,
    )(A, all_emb_c, all_emb_f)


# ---------------------------------------------------------------------------
# Wrappers
# ---------------------------------------------------------------------------
def diffnet_plus_propagate(S, A, user_embs, item_embs, W_stack, *,
                           compute_dtype=jnp.bfloat16,
                           force_streamed_gcn_s=False):
    n_users, hidden = user_embs.shape
    hop = W_stack.shape[0]
    cdt = jnp.dtype(compute_dtype)
    cap, tile_budget = _vmem_budget()

    u0 = user_embs.astype(jnp.float32)
    i0 = item_embs.astype(jnp.float32)
    W = W_stack.astype(jnp.float32)
    W1 = W[:, :hidden, :]                      # (hop, h, h)
    W2 = W[:, hidden:, :]                      # (hop, h, h)

    # ---- GCN_s -----------------------------------------------------------
    # S VMEM-resident (read from HBM once for all hops) when it fits with
    # headroom; otherwise streamed by row tiles once per hop.
    resident_need = 2 * S.nbytes + 8 * u0.nbytes + 2 * W.nbytes + (2 << 20)
    use_resident = (not force_streamed_gcn_s) and resident_need <= int(0.70 * cap)
    if use_resident:
        u_s = _gcn_s_resident(S, u0, W1, W2, cap=cap)
    else:
        u = u0
        hp = jax.lax.Precision.HIGHEST
        for k in range(hop):
            uW1 = jnp.dot(u, W1[k], precision=hp).astype(cdt)   # tiny (n, h) -> resident
            uW2 = jnp.dot(u, W2[k], precision=hp)                # tiny (n, h) f32, streamed
            u = _gcn_s_hop(S, uW1, uW2, tile_budget=tile_budget, cap=cap)
            # TODO(synk): F.dropout between hops skipped (eval / training=False).
        u_s = u

    # ---- GCN_a + combine --------------------------------------------------
    all_emb = jnp.concatenate([u0, i0], axis=0)       # (n_all, hidden) f32, tiny
    all_emb_c = all_emb.astype(cdt)
    light = _gcn_a(A, all_emb_c, all_emb, tile_budget=tile_budget, cap=cap)
    user_out = 0.5 * u_s + 0.5 * light[:n_users]      # tiny wrapper combine
    item_out = light[n_users:]
    return user_out, item_out


def diffnet_plus_forward(users, pos, neg, user_embs, item_embs, S, A, W_stack, *,
                         compute_dtype=jnp.bfloat16,
                         force_streamed_gcn_s=False):
    all_user, all_item = diffnet_plus_propagate(
        S, A, user_embs, item_embs, W_stack,
        compute_dtype=compute_dtype, force_streamed_gcn_s=force_streamed_gcn_s)
    users_emb = jnp.take(all_user, users, axis=0)
    pos_emb = jnp.take(all_item, pos, axis=0)
    neg_emb = jnp.take(all_item, neg, axis=0)
    return users_emb, pos_emb, neg_emb


# ---------------------------------------------------------------------------
# Pure-JAX reference (mirrors the PyTorch code) for verification
# ---------------------------------------------------------------------------
def _reference_forward(users, pos, neg, user_embs, item_embs, S, A, W_stack):
    hp = jax.lax.Precision.HIGHEST
    n_users = user_embs.shape[0]
    hop = W_stack.shape[0]
    u = user_embs
    for k in range(hop):
        new_u = jnp.matmul(S, u, precision=hp)
        u = jnp.tanh(jnp.matmul(jnp.concatenate([new_u, u], axis=1),
                                W_stack[k], precision=hp))
    all_emb = jnp.concatenate([user_embs, item_embs], axis=0)
    embs = jnp.stack([all_emb, jnp.matmul(A, all_emb, precision=hp)], axis=1)
    light = jnp.mean(embs, axis=1)
    user_a, item_a = light[:n_users], light[n_users:]
    all_user = 0.5 * u + 0.5 * user_a
    return all_user[users], item_a[pos], item_a[neg]


def _check(got, exp, tol):
    for g, e in zip(got, exp):
        assert g.shape == e.shape, (g.shape, e.shape)
        gf = g.astype(jnp.float32)
        assert jnp.allclose(gf, e, atol=tol, rtol=tol), \
            float(jnp.max(jnp.abs(gf - e)))


# ---------------------------------------------------------------------------
if __name__ == "__main__":
    n_users, n_items, hidden, hop = 256, 192, 32, 2
    batch = 8

    key = jax.random.PRNGKey(0)
    k_u, k_i, k_s, k_a, k_w, k_idx = jax.random.split(key, 6)

    user_embs = jax.random.normal(k_u, (n_users, hidden), jnp.float32) * 0.1
    item_embs = jax.random.normal(k_i, (n_items, hidden), jnp.float32) * 0.1

    # Dense row-normalized adjacency stand-ins for the sparse S and A.
    S_raw = jax.random.uniform(k_s, (n_users, n_users), jnp.float32)
    S = S_raw / jnp.sum(S_raw, axis=1, keepdims=True)
    n_all = n_users + n_items
    A_raw = jax.random.uniform(k_a, (n_all, n_all), jnp.float32)
    A = A_raw / jnp.sum(A_raw, axis=1, keepdims=True)

    # Xavier-uniform init for W_k: (2*hidden, hidden)
    bound = (6.0 / (2 * hidden + hidden)) ** 0.5
    W_stack = jax.random.uniform(
        k_w, (hop, 2 * hidden, hidden), jnp.float32, minval=-bound, maxval=bound)

    ku1, ku2, ku3 = jax.random.split(k_idx, 3)
    users = jax.random.randint(ku1, (batch,), 0, n_users, jnp.int32)
    pos = jax.random.randint(ku2, (batch,), 0, n_items, jnp.int32)
    neg = jax.random.randint(ku3, (batch,), 0, n_items, jnp.int32)

    ref = _reference_forward(users, pos, neg, user_embs, item_embs, S, A, W_stack)

    # f32, S-resident GCN_s path (auto-selected: S fits in VMEM)
    got = diffnet_plus_forward(users, pos, neg, user_embs, item_embs, S, A,
                               W_stack, compute_dtype=jnp.float32)
    jax.block_until_ready(got)
    _check(got, ref, 2e-3)

    # f32, streamed GCN_s path (forced) — exercises the row-tiled kernels
    got = diffnet_plus_forward(users, pos, neg, user_embs, item_embs, S, A,
                               W_stack, compute_dtype=jnp.float32,
                               force_streamed_gcn_s=True)
    jax.block_until_ready(got)
    _check(got, ref, 2e-3)

    # bf16 perf path (f32 adjacencies streamed, per-tile cast, f32 accumulate)
    got = diffnet_plus_forward(users, pos, neg, user_embs, item_embs, S, A,
                               W_stack, compute_dtype=jnp.bfloat16)
    jax.block_until_ready(got)
    _check(got, ref, 5e-2)

    got = diffnet_plus_forward(users, pos, neg, user_embs, item_embs, S, A,
                               W_stack, compute_dtype=jnp.bfloat16,
                               force_streamed_gcn_s=True)
    jax.block_until_ready(got)
    _check(got, ref, 5e-2)

    print("KERNEL_OK")
</pallas_src>

<mosaic_0001>
module attributes {stable_mosaic.version = 11 : i64} {
  func.func @_gcn_s_resident_kernel(%arg0: i32, %arg1: memref<256x256xf32, #tpu.memory_space<vmem>>, %arg2: memref<256x32xf32, #tpu.memory_space<vmem>>, %arg3: memref<2x32x32xf32, #tpu.memory_space<vmem>>, %arg4: memref<2x32x32xf32, #tpu.memory_space<vmem>>, %arg5: memref<256x32xf32, #tpu.memory_space<vmem>>) attributes {dimension_semantics = [#tpu.dimension_semantics<arbitrary>], iteration_bounds = array<i64: 1>, scalar_prefetch = 0 : i64, scratch_operands = 0 : i64, tpu.core_type = #tpu.core_type<tc>, window_params = [{pipeline_mode = #tpu.pipeline_mode<synchronous>, transform_indices = @transform_0, window_bounds = array<i64: 256, 256>}, {pipeline_mode = #tpu.pipeline_mode<synchronous>, transform_indices = @transform_1, window_bounds = array<i64: 256, 32>}, {pipeline_mode = #tpu.pipeline_mode<synchronous>, transform_indices = @transform_2, window_bounds = array<i64: 2, 32, 32>}, {pipeline_mode = #tpu.pipeline_mode<synchronous>, transform_indices = @transform_3, window_bounds = array<i64: 2, 32, 32>}, {pipeline_mode = #tpu.pipeline_mode<synchronous>, transform_indices = @transform_4, window_bounds = array<i64: 256, 32>}]} {
    %c0 = arith.constant 0 : index
    %c0_0 = arith.constant 0 : index
    %0 = vector.load %arg1[%c0, %c0_0] : memref<256x256xf32, #tpu.memory_space<vmem>>, vector<256x256xf32>
    %c0_1 = arith.constant 0 : index
    %c0_2 = arith.constant 0 : index
    %1 = vector.load %arg2[%c0_1, %c0_2] : memref<256x32xf32, #tpu.memory_space<vmem>>, vector<256x32xf32>
    %c0_3 = arith.constant 0 : index
    %c0_4 = arith.constant 0 : index
    %c0_5 = arith.constant 0 : index
    %2 = vector.load %arg3[%c0_3, %c0_4, %c0_5] : memref<2x32x32xf32, #tpu.memory_space<vmem>>, vector<1x32x32xf32>
    %3 = vector.shape_cast %2 : vector<1x32x32xf32> to vector<32x32xf32>
    %cst = arith.constant dense<0.000000e+00> : vector<256x32xf32>
    %4 = tpu.matmul %1, %3, %cst {dimension_numbers = #tpu.dot_dimension_numbers<[1], [0], [0], [1], [0, 0, 1, 1], [], []>} : vector<256x32xf32>, vector<32x32xf32>, vector<256x32xf32> -> vector<256x32xf32>
    %c0_6 = arith.constant 0 : index
    %c0_7 = arith.constant 0 : index
    %c0_8 = arith.constant 0 : index
    %5 = vector.load %arg4[%c0_6, %c0_7, %c0_8] : memref<2x32x32xf32, #tpu.memory_space<vmem>>, vector<1x32x32xf32>
    %6 = vector.shape_cast %5 : vector<1x32x32xf32> to vector<32x32xf32>
    %cst_9 = arith.constant dense<0.000000e+00> : vector<256x32xf32>
    %7 = tpu.matmul %1, %6, %cst_9 {dimension_numbers = #tpu.dot_dimension_numbers<[1], [0], [0], [1], [0, 0, 1, 1], [], []>} : vector<256x32xf32>, vector<32x32xf32>, vector<256x32xf32> -> vector<256x32xf32>
    %cst_10 = arith.constant dense<0.000000e+00> : vector<256x32xf32>
    %8 = tpu.matmul %0, %4, %cst_10 {dimension_numbers = #tpu.dot_dimension_numbers<[1], [0], [0], [1], [0, 0, 1, 1], [], []>} : vector<256x256xf32>, vector<256x32xf32>, vector<256x32xf32> -> vector<256x32xf32>
    %9 = arith.addf %8, %7 : vector<256x32xf32>
    %10 = math.tanh %9 : vector<256x32xf32>
    %c1 = arith.constant 1 : index
    %c0_11 = arith.constant 0 : index
    %c0_12 = arith.constant 0 : index
    %11 = vector.load %arg3[%c1, %c0_11, %c0_12] : memref<2x32x32xf32, #tpu.memory_space<vmem>>, vector<1x32x32xf32>
    %12 = vector.shape_cast %11 : vector<1x32x32xf32> to vector<32x32xf32>
    %cst_13 = arith.constant dense<0.000000e+00> : vector<256x32xf32>
    %13 = tpu.matmul %10, %12, %cst_13 {dimension_numbers = #tpu.dot_dimension_numbers<[1], [0], [0], [1], [0, 0, 1, 1], [], []>} : vector<256x32xf32>, vector<32x32xf32>, vector<256x32xf32> -> vector<256x32xf32>
    %c1_14 = arith.constant 1 : index
    %c0_15 = arith.constant 0 : index
    %c0_16 = arith.constant 0 : index
    %14 = vector.load %arg4[%c1_14, %c0_15, %c0_16] : memref<2x32x32xf32, #tpu.memory_space<vmem>>, vector<1x32x32xf32>
    %15 = vector.shape_cast %14 : vector<1x32x32xf32> to vector<32x32xf32>
    %cst_17 = arith.constant dense<0.000000e+00> : vector<256x32xf32>
    %16 = tpu.matmul %10, %15, %cst_17 {dimension_numbers = #tpu.dot_dimension_numbers<[1], [0], [0], [1], [0, 0, 1, 1], [], []>} : vector<256x32xf32>, vector<32x32xf32>, vector<256x32xf32> -> vector<256x32xf32>
    %cst_18 = arith.constant dense<0.000000e+00> : vector<256x32xf32>
    %17 = tpu.matmul %0, %13, %cst_18 {dimension_numbers = #tpu.dot_dimension_numbers<[1], [0], [0], [1], [0, 0, 1, 1], [], []>} : vector<256x256xf32>, vector<256x32xf32>, vector<256x32xf32> -> vector<256x32xf32>
    %18 = arith.addf %17, %16 : vector<256x32xf32>
    %19 = math.tanh %18 : vector<256x32xf32>
    %c0_19 = arith.constant 0 : index
    %c0_20 = arith.constant 0 : index
    %20 = vector.load %arg5[%c0_19, %c0_20] : memref<256x32xf32, #tpu.memory_space<vmem>>, vector<256x32xf32>
    tpu.vector_store %arg5[%c0_19, %c0_20], %19 {strides = array<i32>} : memref<256x32xf32, #tpu.memory_space<vmem>>, vector<256x32xf32>,
    return
  }
  func.func @transform_0(%arg0: i32) -> (i32, i32) {
    %c0_i32 = arith.constant 0 : i32
    %c0_i32_0 = arith.constant 0 : i32
    %c0_i32_1 = arith.constant 0 : i32
    return %c0_i32, %c0_i32_0 : i32, i32
  }
  func.func @transform_1(%arg0: i32) -> (i32, i32) {
    %c0_i32 = arith.constant 0 : i32
    %c0_i32_0 = arith.constant 0 : i32
    %c0_i32_1 = arith.constant 0 : i32
    return %c0_i32, %c0_i32_0 : i32, i32
  }
  func.func @transform_2(%arg0: i32) -> (i32, i32, i32) {
    %c0_i32 = arith.constant 0 : i32
    %c0_i32_0 = arith.constant 0 : i32
    %c0_i32_1 = arith.constant 0 : i32
    %c0_i32_2 = arith.constant 0 : i32
    return %c0_i32, %c0_i32_0, %c0_i32_1 : i32, i32, i32
  }
  func.func @transform_3(%arg0: i32) -> (i32, i32, i32) {
    %c0_i32 = arith.constant 0 : i32
    %c0_i32_0 = arith.constant 0 : i32
    %c0_i32_1 = arith.constant 0 : i32
    %c0_i32_2 = arith.constant 0 : i32
    return %c0_i32, %c0_i32_0, %c0_i32_1 : i32, i32, i32
  }
  func.func @transform_4(%arg0: i32) -> (i32, i32) {
    %c0_i32 = arith.constant 0 : i32
    %c0_i32_0 = arith.constant 0 : i32
    %c0_i32_1 = arith.constant 0 : i32
    return %c0_i32, %c0_i32_0 : i32, i32
  }
}

</mosaic_0001>

<llo_original>
// kernel: tpu_custom_call.1
$region0: #{tpu_custom_call.1}
  #allocation0 [shape = 'u32[]', space=smem, size = 0x4, offset = 0x4, fixed_abs, tag = 'smem constant byte address 0x4 - core index']
  #allocation1 [shape = 'u32[144,128]{1,0:T(1,128)}', space=vmem, size = 0x12000, scoped, tag = 'internal scratch']
  %s0 = inlined_call_operand.hbm [shape: f32[256,256], index: 0, kind: input, shape index: {}]
  %s1 = inlined_call_operand.vmem [shape: f32[256,32], index: 1, kind: input, shape index: {}]
  %s2 = inlined_call_operand.vmem [shape: f32[2,32,32], index: 2, kind: input, shape index: {}]
  %s3 = inlined_call_operand.vmem [shape: f32[2,32,32], index: 3, kind: input, shape index: {}]
  %s4 = inlined_call_operand.vmem [shape: f32[256,32], index: 4, kind: output, shape index: {}]
  %s5 = sld [smem:[#allocation0]]
  $region30: #{tpu_custom_call.1} parent=0
    _
  %s7 = ssub.s32 1, %s5
  %s8 = scalar_select 0, %s7, %s5
  $region1: #{tpu_custom_call.1} parent=0
    #allocation2 [shape = 'u8[262144]{0}', space=vmem, size = 0x40000, scoped, tag = 'input window, operand 0, single buffered']
    #allocation3 [shape = 's32[1]{0}', space=sflag, size = 0x4, scoped, tag = 'scoped memory for tpu_custom_call.1']
    %9 = vsyncpa [#allocation3], 0
    // Predicated region
    $region2: #{tpu_custom_call.1} parent=1 // pred_check
      _
    $region3: #{tpu_custom_call.1} parent=1 // pred_check_branch
      %11 = sbr.rel (0) target = $region5
    $region4: #{tpu_custom_call.1} parent=1 // pred_region
      %s13 = ssub.s32 8192, 8192
      %14 = vsyncadd [#allocation3], %s13
      %s15 = sshll.u32 [#allocation2], 4
      %s16 = int_to_ptr.vmem [resolvable:$true] %s15
      %21 = dma.hbm_to_vmem [thread:$0]  %s0, 8192, %s16, [#allocation3], 256, 256, 16
    $region5: #{tpu_custom_call.1} parent=1 // pred_fallthru
      _
    // Predicated region
    $region6: #{tpu_custom_call.1} parent=1 // pred_check
      _
    $region7: #{tpu_custom_call.1} parent=1 // pred_check_branch
      %23 = sbr.rel (0) target = $region9
    $region8: #{tpu_custom_call.1} parent=1 // pred_region
      _
    $region9: #{tpu_custom_call.1} parent=1 // pred_fallthru
      _
    // Predicated region
    $region10: #{tpu_custom_call.1} parent=1 // pred_check
      _
    $region11: #{tpu_custom_call.1} parent=1 // pred_check_branch
      %25 = sbr.rel (0) target = $region13
    $region12: #{tpu_custom_call.1} parent=1 // pred_region
      _
    $region13: #{tpu_custom_call.1} parent=1 // pred_fallthru
      _
    // Predicated region
    $region14: #{tpu_custom_call.1} parent=1 // pred_check
      _
    $region15: #{tpu_custom_call.1} parent=1 // pred_check_branch
      %27 = sbr.rel (0) target = $region17
    $region16: #{tpu_custom_call.1} parent=1 // pred_region
      _
    $region17: #{tpu_custom_call.1} parent=1 // pred_fallthru
      _
    // Predicated region
    $region18: #{tpu_custom_call.1} parent=1 // pred_check
      _
    $region19: #{tpu_custom_call.1} parent=1 // pred_check_branch
      %29 = sbr.rel (0) target = $region21
    $region20: #{tpu_custom_call.1} parent=1 // pred_region
      %30 = dma.done [#allocation3], 8192
    $region21: #{tpu_custom_call.1} parent=1 // pred_fallthru
      _
    %v31 = vld [vmem:[#allocation2] sm:$0xff]
    %v32 = vld [vmem:[#allocation2 + $0x8] sm:$0xff]
    %v33 = vld [vmem:[#allocation2 + $0x10] sm:$0xff]
    %v34 = vld [vmem:[#allocation2 + $0x18] sm:$0xff]
    %v35 = vld [vmem:[#allocation2 + $0x20] sm:$0xff]
    %v36 = vld [vmem:[#allocation2 + $0x28] sm:$0xff]
    %v37 = vld [vmem:[#allocation2 + $0x30] sm:$0xff]
    %v38 = vld [vmem:[#allocation2 + $0x38] sm:$0xff]
    %v39 = vld [vmem:[#allocation2 + $0x40] sm:$0xff]
    %v40 = vld [vmem:[#allocation2 + $0x48] sm:$0xff]
    %v41 = vld [vmem:[#allocation2 + $0x50] sm:$0xff]
    %v42 = vld [vmem:[#allocation2 + $0x58] sm:$0xff]
    %v43 = vld [vmem:[#allocation2 + $0x60] sm:$0xff]
    %v44 = vld [vmem:[#allocation2 + $0x68] sm:$0xff]
    %v45 = vld [vmem:[#allocation2 + $0x70] sm:$0xff]
    %v46 = vld [vmem:[#allocation2 + $0x78] sm:$0xff]
    %v47 = vld [vmem:[#allocation2 + $0x80] sm:$0xff]
    %v48 = vld [vmem:[#allocation2 + $0x88] sm:$0xff]
    %v49 = vld [vmem:[#allocation2 + $0x90] sm:$0xff]
    %v50 = vld [vmem:[#allocation2 + $0x98] sm:$0xff]
    %v51 = vld [vmem:[#allocation2 + $0xa0] sm:$0xff]
    %v52 = vld [vmem:[#allocation2 + $0xa8] sm:$0xff]
    %v53 = vld [vmem:[#allocation2 + $0xb0] sm:$0xff]
    %v54 = vld [vmem:[#allocation2 + $0xb8] sm:$0xff]
    %v55 = vld [vmem:[#allocation2 + $0xc0] sm:$0xff]
    %v56 = vld [vmem:[#allocation2 + $0xc8] sm:$0xff]
    %v57 = vld [vmem:[#allocation2 + $0xd0] sm:$0xff]
    %v58 = vld [vmem:[#allocation2 + $0xd8] sm:$0xff]
    %v59 = vld [vmem:[#allocation2 + $0xe0] sm:$0xff]
    %v60 = vld [vmem:[#allocation2 + $0xe8] sm:$0xff]
    %v61 = vld [vmem:[#allocation2 + $0xf0] sm:$0xff]
    %v62 = vld [vmem:[#allocation2 + $0xf8] sm:$0xff]
    %v63 = vld [vmem:[#allocation2 + $0x100] sm:$0xff]
    %v64 = vld [vmem:[#allocation2 + $0x108] sm:$0xff]
    %v65 = vld [vmem:[#allocation2 + $0x110] sm:$0xff]
    %v66 = vld [vmem:[#allocation2 + $0x118] sm:$0xff]
    %v67 = vld [vmem:[#allocation2 + $0x120] sm:$0xff]
    %v68 = vld [vmem:[#allocation2 + $0x128] sm:$0xff]
    %v69 = vld [vmem:[#allocation2 + $0x130] sm:$0xff]
    %v70 = vld [vmem:[#allocation2 + $0x138] sm:$0xff]
    %v71 = vld [vmem:[#allocation2 + $0x140] sm:$0xff]
    %v72 = vld [vmem:[#allocation2 + $0x148] sm:$0xff]
    %v73 = vld [vmem:[#allocation2 + $0x150] sm:$0xff]
    %v74 = vld [vmem:[#allocation2 + $0x158] sm:$0xff]
    %v75 = vld [vmem:[#allocation2 + $0x160] sm:$0xff]
    %v76 = vld [vmem:[#allocation2 + $0x168] sm:$0xff]
    %v77 = vld [vmem:[#allocation2 + $0x170] sm:$0xff]
    %v78 = vld [vmem:[#allocation2 + $0x178] sm:$0xff]
    %v79 = vld [vmem:[#allocation2 + $0x180] sm:$0xff]
    %v80 = vld [vmem:[#allocation2 + $0x188] sm:$0xff]
    %v81 = vld [vmem:[#allocation2 + $0x190] sm:$0xff]
    %v82 = vld [vmem:[#allocation2 + $0x198] sm:$0xff]
    %v83 = vld [vmem:[#allocation2 + $0x1a0] sm:$0xff]
    %v84 = vld [vmem:[#allocation2 + $0x1a8] sm:$0xff]
    %v85 = vld [vmem:[#allocation2 + $0x1b0] sm:$0xff]
    %v86 = vld [vmem:[#allocation2 + $0x1b8] sm:$0xff]
    %v87 = vld [vmem:[#allocation2 + $0x1c0] sm:$0xff]
    %v88 = vld [vmem:[#allocation2 + $0x1c8] sm:$0xff]
    %v89 = vld [vmem:[#allocation2 + $0x1d0] sm:$0xff]
    %v90 = vld [vmem:[#allocation2 + $0x1d8] sm:$0xff]
    %v91 = vld [vmem:[#allocation2 + $0x1e0] sm:$0xff]
    %v92 = vld [vmem:[#allocation2 + $0x1e8] sm:$0xff]
    %v93 = vld [vmem:[#allocation2 + $0x1f0] sm:$0xff]
    %v94 = vld [vmem:[#allocation2 + $0x1f8] sm:$0xff]
    %v95 = vld [vmem:[%s1] sm:$0xff]
    %v96 = vld [vmem:[%s1 + $0x8] sm:$0xff]
    %v97 = vld [vmem:[%s1 + $0x10] sm:$0xff]
    %v98 = vld [vmem:[%s1 + $0x18] sm:$0xff]
    %v99 = vld [vmem:[%s1 + $0x20] sm:$0xff]
    %v100 = vld [vmem:[%s1 + $0x28] sm:$0xff]
    %v101 = vld [vmem:[%s1 + $0x30] sm:$0xff]
    %v102 = vld [vmem:[%s1 + $0x38] sm:$0xff]
    %v103 = vld [vmem:[%s1 + $0x40] sm:$0xff]
    %v104 = vld [vmem:[%s1 + $0x48] sm:$0xff]
    %v105 = vld [vmem:[%s1 + $0x50] sm:$0xff]
    %v106 = vld [vmem:[%s1 + $0x58] sm:$0xff]
    %v107 = vld [vmem:[%s1 + $0x60] sm:$0xff]
    %v108 = vld [vmem:[%s1 + $0x68] sm:$0xff]
    %v109 = vld [vmem:[%s1 + $0x70] sm:$0xff]
    %v110 = vld [vmem:[%s1 + $0x78] sm:$0xff]
    %v111 = vld [vmem:[%s1 + $0x80] sm:$0xff]
    %v112 = vld [vmem:[%s1 + $0x88] sm:$0xff]
    %v113 = vld [vmem:[%s1 + $0x90] sm:$0xff]
    %v114 = vld [vmem:[%s1 + $0x98] sm:$0xff]
    %v115 = vld [vmem:[%s1 + $0xa0] sm:$0xff]
    %v116 = vld [vmem:[%s1 + $0xa8] sm:$0xff]
    %v117 = vld [vmem:[%s1 + $0xb0] sm:$0xff]
    %v118 = vld [vmem:[%s1 + $0xb8] sm:$0xff]
    %v119 = vld [vmem:[%s1 + $0xc0] sm:$0xff]
    %v120 = vld [vmem:[%s1 + $0xc8] sm:$0xff]
    %v121 = vld [vmem:[%s1 + $0xd0] sm:$0xff]
    %v122 = vld [vmem:[%s1 + $0xd8] sm:$0xff]
    %v123 = vld [vmem:[%s1 + $0xe0] sm:$0xff]
    %v124 = vld [vmem:[%s1 + $0xe8] sm:$0xff]
    %v125 = vld [vmem:[%s1 + $0xf0] sm:$0xff]
    %v126 = vld [vmem:[%s1 + $0xf8] sm:$0xff]
    %v127 = vld [vmem:[%s2] sm:$0xff]
    %v128 = vld [vmem:[%s2 + $0x8] sm:$0xff]
    %v129 = vld [vmem:[%s2 + $0x10] sm:$0xff]
    %v130 = vld [vmem:[%s2 + $0x18] sm:$0xff]
    %vm131 = vcmask 261120
    %v133 = vsel %vm131, %v95, 0
    %v136 = vsel %vm131, %v96, 0
    %v139 = vsel %vm131, %v97, 0
    %v142 = vsel %vm131, %v98, 0
    %v145 = vsel %vm131, %v99, 0
    %v148 = vsel %vm131, %v100, 0
    %v151 = vsel %vm131, %v101, 0
    %v154 = vsel %vm131, %v102, 0
    %v157 = vsel %vm131, %v103, 0
    %v160 = vsel %vm131, %v104, 0
    %v163 = vsel %vm131, %v105, 0
    %v166 = vsel %vm131, %v106, 0
    %v169 = vsel %vm131, %v107, 0
    %v172 = vsel %vm131, %v108, 0
    %v175 = vsel %vm131, %v109, 0
    %v178 = vsel %vm131, %v110, 0
    %v181 = vsel %vm131, %v111, 0
    %v184 = vsel %vm131, %v112, 0
    %v187 = vsel %vm131, %v113, 0
    %v190 = vsel %vm131, %v114, 0
    %v193 = vsel %vm131, %v115, 0
    %v196 = vsel %vm131, %v116, 0
    %v199 = vsel %vm131, %v117, 0
    %v202 = vsel %vm131, %v118, 0
    %v205 = vsel %vm131, %v119, 0
    %v208 = vsel %vm131, %v120, 0
    %v211 = vsel %vm131, %v121, 0
    %v214 = vsel %vm131, %v122, 0
    %v217 = vsel %vm131, %v123, 0
    %v220 = vsel %vm131, %v124, 0
    %v223 = vsel %vm131, %v125, 0
    %v226 = vsel %vm131, %v126, 0
    %228 = vmatprep.subr.mxu0 0.0
    %229 = vmatpush1.msra.mxu0 %v127
    %230 = vmatprep.subr.mxu0 0.0
    %231 = vmatpush1.msra.mxu0 %v128
    %232 = vmatprep.subr.mxu0 0.0
    %233 = vmatpush1.msra.mxu0 %v129
    %234 = vmatprep.subr.mxu0 0.0
    %235 = vmatpush1.msra.mxu0 %v130
    %236 = vmatprep.subr.mxu0 0.0
    %237 = vmatpush1.msra.mxu0 0.0
    %238 = vmatprep.subr.mxu0 0.0
    %239 = vmatpush1.msra.mxu0 0.0
    %240 = vmatprep.subr.mxu0 0.0
    %241 = vmatpush1.msra.mxu0 0.0
    %242 = vmatprep.subr.mxu0 0.0
    %243 = vmatpush1.msra.mxu0 0.0
    %244 = vmatprep.subr.mxu0 0.0
    %245 = vmatpush1.msra.mxu0 0.0
    %246 = vmatprep.subr.mxu0 0.0
    %247 = vmatpush1.msra.mxu0 0.0
    %248 = vmatprep.subr.mxu0 0.0
    %249 = vmatpush1.msra.mxu0 0.0
    %250 = vmatprep.subr.mxu0 0.0
    %251 = vmatpush1.msra.mxu0 0.0
    %252 = vmatprep.subr.mxu0 0.0
    %253 = vmatpush1.msra.mxu0 0.0
    %254 = vmatprep.subr.mxu0 0.0
    %255 = vmatpush1.msra.mxu0 0.0
    %256 = vmatprep.subr.mxu0 0.0
    %257 = vmatpush1.msra.mxu0 0.0
    %258 = vmatprep.subr.mxu0 0.0
    %259 = vmatpush1.msra.mxu0 0.0
    %260 = vmatprep.subr.mxu0 0.0
    %261 = vmatpush1.msra.mxu0 0.0
    %262 = vmatprep.subr.mxu0 0.0
    %263 = vmatpush1.msra.mxu0 0.0
    %264 = vmatprep.subr.mxu0 0.0
    %265 = vmatpush1.msra.mxu0 0.0
    %266 = vmatprep.subr.mxu0 0.0
    %267 = vmatpush1.msra.mxu0 0.0
    %268 = vmatprep.subr.mxu0 0.0
    %269 = vmatpush1.msra.mxu0 0.0
    %270 = vmatprep.subr.mxu0 0.0
    %271 = vmatpush1.msra.mxu0 0.0
    %272 = vmatprep.subr.mxu0 0.0
    %273 = vmatpush1.msra.mxu0 0.0
    %274 = vmatprep.subr.mxu0 0.0
    %275 = vmatpush1.msra.mxu0 0.0
    %276 = vmatprep.subr.mxu0 0.0
    %277 = vmatpush1.msra.mxu0 0.0
    %278 = vmatprep.subr.mxu0 0.0
    %279 = vmatpush1.msra.mxu0 0.0
    %280 = vmatprep.subr.mxu0 0.0
    %281 = vmatpush1.msra.mxu0 0.0
    %282 = vmatprep.subr.mxu0 0.0
    %283 = vmatpush1.msra.mxu0 0.0
    %284 = vmatprep.subr.mxu0 0.0
    %285 = vmatpush1.msra.mxu0 0.0
    %286 = vmatprep.subr.mxu0 0.0
    %287 = vmatpush1.msra.mxu0 0.0
    %288 = vmatprep.subr.mxu0 0.0
    %289 = vmatpush1.msra.mxu0 0.0
    %290 = vmatprep.subr.mxu0 0.0
    %291 = vmatpush1.msra.mxu0 0.0
    %292 = vmatprep.mubr.f32.mxu0 0.0
    %293 = vmatmul.mubr.f32.gmra.mrb[0].mxu0 %v133
    %v294 = vpop.f32.mrb[0].mxu0
    %v295 = vadd.f32 0.0, %v294
    %v296 = vpop.f32.mrb[0].mxu0
    %297 = vmatprep.mubr.f32.mxu0 0.0
    %298 = vmatmul.mubr.f32.gmra.mrb[0].mxu0 %v136
    %v299 = vpop.f32.mrb[0].mxu0
    %v300 = vadd.f32 0.0, %v299
    %v301 = vpop.f32.mrb[0].mxu0
    %302 = vmatprep.mubr.f32.mxu0 0.0
    %303 = vmatmul.mubr.f32.gmra.mrb[0].mxu0 %v139
    %v304 = vpop.f32.mrb[0].mxu0
    %v305 = vadd.f32 0.0, %v304
    %v306 = vpop.f32.mrb[0].mxu0
    %307 = vmatprep.mubr.f32.mxu0 0.0
    %308 = vmatmul.mubr.f32.gmra.mrb[0].mxu0 %v142
    %v309 = vpop.f32.mrb[0].mxu0
    %v310 = vadd.f32 0.0, %v309
    %v311 = vpop.f32.mrb[0].mxu0
    %312 = vmatprep.mubr.f32.mxu0 0.0
    %313 = vmatmul.mubr.f32.gmra.mrb[0].mxu0 %v145
    %v314 = vpop.f32.mrb[0].mxu0
    %v315 = vadd.f32 0.0, %v314
    %v316 = vpop.f32.mrb[0].mxu0
    %317 = vmatprep.mubr.f32.mxu0 0.0
    %318 = vmatmul.mubr.f32.gmra.mrb[0].mxu0 %v148
    %v319 = vpop.f32.mrb[0].mxu0
    %v320 = vadd.f32 0.0, %v319
    %v321 = vpop.f32.mrb[0].mxu0
    %322 = vmatprep.mubr.f32.mxu0 0.0
    %323 = vmatmul.mubr.f32.gmra.mrb[0].mxu0 %v151
    %v324 = vpop.f32.mrb[0].mxu0
    %v325 = vadd.f32 0.0, %v324
    %v326 = vpop.f32.mrb[0].mxu0
    %327 = vmatprep.mubr.f32.mxu0 0.0
    %328 = vmatmul.mubr.f32.gmra.mrb[0].mxu0 %v154
    %v329 = vpop.f32.mrb[0].mxu0
    %v330 = vadd.f32 0.0, %v329
    %v331 = vpop.f32.mrb[0].mxu0
    %332 = vmatprep.mubr.f32.mxu0 0.0
    %333 = vmatmul.mubr.f32.gmra.mrb[0].mxu0 %v157
    %v334 = vpop.f32.mrb[0].mxu0
    %v335 = vadd.f32 0.0, %v334
    %v336 = vpop.f32.mrb[0].mxu0
    %337 = vmatprep.mubr.f32.mxu0 0.0
    %338 = vmatmul.mubr.f32.gmra.mrb[0].mxu0 %v160
    %v339 = vpop.f32.mrb[0].mxu0
    %v340 = vadd.f32 0.0, %v339
    %v341 = vpop.f32.mrb[0].mxu0
    %342 = vmatprep.mubr.f32.mxu0 0.0
    %343 = vmatmul.mubr.f32.gmra.mrb[0].mxu0 %v163
    %v344 = vpop.f32.mrb[0].mxu0
    %v345 = vadd.f32 0.0, %v344
    %v346 = vpop.f32.mrb[0].mxu0
    %347 = vmatprep.mubr.f32.mxu0 0.0
    %348 = vmatmul.mubr.f32.gmra.mrb[0].mxu0 %v166
    %v349 = vpop.f32.mrb[0].mxu0
    %v350 = vadd.f32 0.0, %v349
    %v351 = vpop.f32.mrb[0].mxu0
    %352 = vmatprep.mubr.f32.mxu0 0.0
    %353 = vmatmul.mubr.f32.gmra.mrb[0].mxu0 %v169
    %v354 = vpop.f32.mrb[0].mxu0
    %v355 = vadd.f32 0.0, %v354
    %v356 = vpop.f32.mrb[0].mxu0
    %357 = vmatprep.mubr.f32.mxu0 0.0
    %358 = vmatmul.mubr.f32.gmra.mrb[0].mxu0 %v172
    %v359 = vpop.f32.mrb[0].mxu0
    %v360 = vadd.f32 0.0, %v359
    %v361 = vpop.f32.mrb[0].mxu0
    %362 = vmatprep.mubr.f32.mxu0 0.0
    %363 = vmatmul.mubr.f32.gmra.mrb[0].mxu0 %v175
    %v364 = vpop.f32.mrb[0].mxu0
    %v365 = vadd.f32 0.0, %v364
    %v366 = vpop.f32.mrb[0].mxu0
    %367 = vmatprep.mubr.f32.mxu0 0.0
    %368 = vmatmul.mubr.f32.gmra.mrb[0].mxu0 %v178
    %v369 = vpop.f32.mrb[0].mxu0
    %v370 = vadd.f32 0.0, %v369
    %v371 = vpop.f32.mrb[0].mxu0
    %372 = vmatprep.mubr.f32.mxu0 0.0
    %373 = vmatmul.mubr.f32.gmra.mrb[0].mxu0 %v181
    %v374 = vpop.f32.mrb[0].mxu0
    %v375 = vadd.f32 0.0, %v374
    %v376 = vpop.f32.mrb[0].mxu0
    %377 = vmatprep.mubr.f32.mxu0 0.0
    %378 = vmatmul.mubr.f32.gmra.mrb[0].mxu0 %v184
    %v379 = vpop.f32.mrb[0].mxu0
    %v380 = vadd.f32 0.0, %v379
    %v381 = vpop.f32.mrb[0].mxu0
    %382 = vmatprep.mubr.f32.mxu0 0.0
    %383 = vmatmul.mubr.f32.gmra.mrb[0].mxu0 %v187
    %v384 = vpop.f32.mrb[0].mxu0
    %v385 = vadd.f32 0.0, %v384
    %v386 = vpop.f32.mrb[0].mxu0
    %387 = vmatprep.mubr.f32.mxu0 0.0
    %388 = vmatmul.mubr.f32.gmra.mrb[0].mxu0 %v190
    %v389 = vpop.f32.mrb[0].mxu0
    %v390 = vadd.f32 0.0, %v389
    %v391 = vpop.f32.mrb[0].mxu0
    %392 = vmatprep.mubr.f32.mxu0 0.0
    %393 = vmatmul.mubr.f32.gmra.mrb[0].mxu0 %v193
    %v394 = vpop.f32.mrb[0].mxu0
    %v395 = vadd.f32 0.0, %v394
    %v396 = vpop.f32.mrb[0].mxu0
    %397 = vmatprep.mubr.f32.mxu0 0.0
    %398 = vmatmul.mubr.f32.gmra.mrb[0].mxu0 %v196
    %v399 = vpop.f32.mrb[0].mxu0
    %v400 = vadd.f32 0.0, %v399
    %v401 = vpop.f32.mrb[0].mxu0
    %402 = vmatprep.mubr.f32.mxu0 0.0
    %403 = vmatmul.mubr.f32.gmra.mrb[0].mxu0 %v199
    %v404 = vpop.f32.mrb[0].mxu0
    %v405 = vadd.f32 0.0, %v404
    %v406 = vpop.f32.mrb[0].mxu0
    %407 = vmatprep.mubr.f32.mxu0 0.0
    %408 = vmatmul.mubr.f32.gmra.mrb[0].mxu0 %v202
    %v409 = vpop.f32.mrb[0].mxu0
    %v410 = vadd.f32 0.0, %v409
    %v411 = vpop.f32.mrb[0].mxu0
    %412 = vmatprep.mubr.f32.mxu0 0.0
    %413 = vmatmul.mubr.f32.gmra.mrb[0].mxu0 %v205
    %v414 = vpop.f32.mrb[0].mxu0
    %v415 = vadd.f32 0.0, %v414
    %v416 = vpop.f32.mrb[0].mxu0
    %417 = vmatprep.mubr.f32.mxu0 0.0
    %418 = vmatmul.mubr.f32.gmra.mrb[0].mxu0 %v208
    %v419 = vpop.f32.mrb[0].mxu0
    %v420 = vadd.f32 0.0, %v419
    %v421 = vpop.f32.mrb[0].mxu0
    %422 = vmatprep.mubr.f32.mxu0 0.0
    %423 = vmatmul.mubr.f32.gmra.mrb[0].mxu0 %v211
    %v424 = vpop.f32.mrb[0].mxu0
    %v425 = vadd.f32 0.0, %v424
    %v426 = vpop.f32.mrb[0].mxu0
    %427 = vmatprep.mubr.f32.mxu0 0.0
    %428 = vmatmul.mubr.f32.gmra.mrb[0].mxu0 %v214
    %v429 = vpop.f32.mrb[0].mxu0
    %v430 = vadd.f32 0.0, %v429
    %v431 = vpop.f32.mrb[0].mxu0
    %432 = vmatprep.mubr.f32.mxu0 0.0
    %433 = vmatmul.mubr.f32.gmra.mrb[0].mxu0 %v217
    %v434 = vpop.f32.mrb[0].mxu0
    %v435 = vadd.f32 0.0, %v434
    %v436 = vpop.f32.mrb[0].mxu0
    %437 = vmatprep.mubr.f32.mxu0 0.0
    %438 = vmatmul.mubr.f32.gmra.mrb[0].mxu0 %v220
    %v439 = vpop.f32.mrb[0].mxu0
    %v440 = vadd.f32 0.0, %v439
    %v441 = vpop.f32.mrb[0].mxu0
    %442 = vmatprep.mubr.f32.mxu0 0.0
    %443 = vmatmul.mubr.f32.gmra.mrb[0].mxu0 %v223
    %v444 = vpop.f32.mrb[0].mxu0
    %v445 = vadd.f32 0.0, %v444
    %v446 = vpop.f32.mrb[0].mxu0
    %447 = vmatprep.mubr.f32.mxu0 0.0
    %448 = vmatmul.mubr.f32.gmra.mrb[0].mxu0 %v226
    %v449 = vpop.f32.mrb[0].mxu0
    %v450 = vadd.f32 0.0, %v449
    %v451 = vpop.f32.mrb[0].mxu0
    %452 = vdwg.mxu0
    %v453 = vld [vmem:[%s3] sm:$0xff]
    %v454 = vld [vmem:[%s3 + $0x8] sm:$0xff]
    %v455 = vld [vmem:[%s3 + $0x10] sm:$0xff]
    %v456 = vld [vmem:[%s3 + $0x18] sm:$0xff]
    %457 = vmatprep.subr.mxu0 0.0
    %458 = vmatpush1.msra.mxu0 %v453
    %459 = vmatprep.subr.mxu0 0.0
    %460 = vmatpush1.msra.mxu0 %v454
    %461 = vmatprep.subr.mxu0 0.0
    %462 = vmatpush1.msra.mxu0 %v455
    %463 = vmatprep.subr.mxu0 0.0
    %464 = vmatpush1.msra.mxu0 %v456
    %465 = vmatprep.subr.mxu0 0.0
    %466 = vmatpush1.msra.mxu0 0.0
    %467 = vmatprep.subr.mxu0 0.0
    %468 = vmatpush1.msra.mxu0 0.0
    %469 = vmatprep.subr.mxu0 0.0
    %470 = vmatpush1.msra.mxu0 0.0
    %471 = vmatprep.subr.mxu0 0.0
    %472 = vmatpush1.msra.mxu0 0.0
    %473 = vmatprep.subr.mxu0 0.0
    %474 = vmatpush1.msra.mxu0 0.0
    %475 = vmatprep.subr.mxu0 0.0
    %476 = vmatpush1.msra.mxu0 0.0
    %477 = vmatprep.subr.mxu0 0.0
    %478 = vmatpush1.msra.mxu0 0.0
    %479 = vmatprep.subr.mxu0 0.0
    %480 = vmatpush1.msra.mxu0 0.0
    %481 = vmatprep.subr.mxu0 0.0
    %482 = vmatpush1.msra.mxu0 0.0
    %483 = vmatprep.subr.mxu0 0.0
    %484 = vmatpush1.msra.mxu0 0.0
    %485 = vmatprep.subr.mxu0 0.0
    %486 = vmatpush1.msra.mxu0 0.0
    %487 = vmatprep.subr.mxu0 0.0
    %488 = vmatpush1.msra.mxu0 0.0
    %489 = vmatprep.subr.mxu0 0.0
    %490 = vmatpush1.msra.mxu0 0.0
    %491 = vmatprep.subr.mxu0 0.0
    %492 = vmatpush1.msra.mxu0 0.0
    %493 = vmatprep.subr.mxu0 0.0
    %494 = vmatpush1.msra.mxu0 0.0
    %495 = vmatprep.subr.mxu0 0.0
    %496 = vmatpush1.msra.mxu0 0.0
    %497 = vmatprep.subr.mxu0 0.0
    %498 = vmatpush1.msra.mxu0 0.0
    %499 = vmatprep.subr.mxu0 0.0
    %500 = vmatpush1.msra.mxu0 0.0
    %501 = vmatprep.subr.mxu0 0.0
    %502 = vmatpush1.msra.mxu0 0.0
    %503 = vmatprep.subr.mxu0 0.0
    %504 = vmatpush1.msra.mxu0 0.0
    %505 = vmatprep.subr.mxu0 0.0
    %506 = vmatpush1.msra.mxu0 0.0
    %507 = vmatprep.subr.mxu0 0.0
    %508 = vmatpush1.msra.mxu0 0.0
    %509 = vmatprep.subr.mxu0 0.0
    %510 = vmatpush1.msra.mxu0 0.0
    %511 = vmatprep.subr.mxu0 0.0
    %512 = vmatpush1.msra.mxu0 0.0
    %513 = vmatprep.subr.mxu0 0.0
    %514 = vmatpush1.msra.mxu0 0.0
    %515 = vmatprep.subr.mxu0 0.0
    %516 = vmatpush1.msra.mxu0 0.0
    %517 = vmatprep.subr.mxu0 0.0
    %518 = vmatpush1.msra.mxu0 0.0
    %519 = vmatprep.subr.mxu0 0.0
    %520 = vmatpush1.msra.mxu0 0.0
    %521 = vmatprep.mubr.f32.mxu0 0.0
    %522 = vmatmul.mubr.f32.gmra.mrb[0].mxu0 %v133
    %v523 = vpop.f32.mrb[0].mxu0
    %v524 = vadd.f32 0.0, %v523
    %v525 = vpop.f32.mrb[0].mxu0
    %526 = vmatprep.mubr.f32.mxu0 0.0
    %527 = vmatmul.mubr.f32.gmra.mrb[0].mxu0 %v136
    %v528 = vpop.f32.mrb[0].mxu0
    %v529 = vadd.f32 0.0, %v528
    %v530 = vpop.f32.mrb[0].mxu0
    %531 = vmatprep.mubr.f32.mxu0 0.0
    %532 = vmatmul.mubr.f32.gmra.mrb[0].mxu0 %v139
    %v533 = vpop.f32.mrb[0].mxu0
    %v534 = vadd.f32 0.0, %v533
    %v535 = vpop.f32.mrb[0].mxu0
    %536 = vmatprep.mubr.f32.mxu0 0.0
    %537 = vmatmul.mubr.f32.gmra.mrb[0].mxu0 %v142
    %v538 = vpop.f32.mrb[0].mxu0
    %v539 = vadd.f32 0.0, %v538
    %v540 = vpop.f32.mrb[0].mxu0
    %541 = vmatprep.mubr.f32.mxu0 0.0
    %542 = vmatmul.mubr.f32.gmra.mrb[0].mxu0 %v145
    %v543 = vpop.f32.mrb[0].mxu0
    %v544 = vadd.f32 0.0, %v543
    %v545 = vpop.f32.mrb[0].mxu0
    %546 = vmatprep.mubr.f32.mxu0 0.0
    %547 = vmatmul.mubr.f32.gmra.mrb[0].mxu0 %v148
    %v548 = vpop.f32.mrb[0].mxu0
    %v549 = vadd.f32 0.0, %v548
    %v550 = vpop.f32.mrb[0].mxu0
    %551 = vmatprep.mubr.f32.mxu0 0.0
    %552 = vmatmul.mubr.f32.gmra.mrb[0].mxu0 %v151
    %v553 = vpop.f32.mrb[0].mxu0
    %v554 = vadd.f32 0.0, %v553
    %v555 = vpop.f32.mrb[0].mxu0
    %556 = vmatprep.mubr.f32.mxu0 0.0
    %557 = vmatmul.mubr.f32.gmra.mrb[0].mxu0 %v154
    %v558 = vpop.f32.mrb[0].mxu0
    %v559 = vadd.f32 0.0, %v558
    %v560 = vpop.f32.mrb[0].mxu0
    %561 = vmatprep.mubr.f32.mxu0 0.0
    %562 = vmatmul.mubr.f32.gmra.mrb[0].mxu0 %v157
    %v563 = vpop.f32.mrb[0].mxu0
    %v564 = vadd.f32 0.0, %v563
    %v565 = vpop.f32.mrb[0].mxu0
    %566 = vmatprep.mubr.f32.mxu0 0.0
    %567 = vmatmul.mubr.f32.gmra.mrb[0].mxu0 %v160
    %v568 = vpop.f32.mrb[0].mxu0
    %v569 = vadd.f32 0.0, %v568
    %v570 = vpop.f32.mrb[0].mxu0
    %571 = vmatprep.mubr.f32.mxu0 0.0
    %572 = vmatmul.mubr.f32.gmra.mrb[0].mxu0 %v163
    %v573 = vpop.f32.mrb[0].mxu0
    %v574 = vadd.f32 0.0, %v573
    %v575 = vpop.f32.mrb[0].mxu0
    %576 = vmatprep.mubr.f32.mxu0 0.0
    %577 = vmatmul.mubr.f32.gmra.mrb[0].mxu0 %v166
    %v578 = vpop.f32.mrb[0].mxu0
    %v579 = vadd.f32 0.0, %v578
    %v580 = vpop.f32.mrb[0].mxu0
    %581 = vmatprep.mubr.f32.mxu0 0.0
    %582 = vmatmul.mubr.f32.gmra.mrb[0].mxu0 %v169
    %v583 = vpop.f32.mrb[0].mxu0
    %v584 = vadd.f32 0.0, %v583
    %v585 = vpop.f32.mrb[0].mxu0
    %586 = vmatprep.mubr.f32.mxu0 0.0
    %587 = vmatmul.mubr.f32.gmra.mrb[0].mxu0 %v172
    %v588 = vpop.f32.mrb[0].mxu0
    %v589 = vadd.f32 0.0, %v588
    %v590 = vpop.f32.mrb[0].mxu0
    %591 = vmatprep.mubr.f32.mxu0 0.0
    %592 = vmatmul.mubr.f32.gmra.mrb[0].mxu0 %v175
    %v593 = vpop.f32.mrb[0].mxu0
    %v594 = vadd.f32 0.0, %v593
    %v595 = vpop.f32.mrb[0].mxu0
    %596 = vmatprep.mubr.f32.mxu0 0.0
    %597 = vmatmul.mubr.f32.gmra.mrb[0].mxu0 %v178
    %v598 = vpop.f32.mrb[0].mxu0
    %v599 = vadd.f32 0.0, %v598
    %v600 = vpop.f32.mrb[0].mxu0
    %601 = vmatprep.mubr.f32.mxu0 0.0
    %602 = vmatmul.mubr.f32.gmra.mrb[0].mxu0 %v181
    %v603 = vpop.f32.mrb[0].mxu0
    %v604 = vadd.f32 0.0, %v603
    %v605 = vpop.f32.mrb[0].mxu0
    %606 = vmatprep.mubr.f32.mxu0 0.0
    %607 = vmatmul.mubr.f32.gmra.mrb[0].mxu0 %v184
    %v608 = vpop.f32.mrb[0].mxu0
    %v609 = vadd.f32 0.0, %v608
    %v610 = vpop.f32.mrb[0].mxu0
    %611 = vmatprep.mubr.f32.mxu0 0.0
    %612 = vmatmul.mubr.f32.gmra.mrb[0].mxu0 %v187
    %v613 = vpop.f32.mrb[0].mxu0
    %v614 = vadd.f32 0.0, %v613
    %v615 = vpop.f32.mrb[0].mxu0
    %616 = vmatprep.mubr.f32.mxu0 0.0
    %617 = vmatmul.mubr.f32.gmra.mrb[0].mxu0 %v190
    %v618 = vpop.f32.mrb[0].mxu0
    %v619 = vadd.f32 0.0, %v618
    %v620 = vpop.f32.mrb[0].mxu0
    %621 = vmatprep.mubr.f32.mxu0 0.0
    %622 = vmatmul.mubr.f32.gmra.mrb[0].mxu0 %v193
    %v623 = vpop.f32.mrb[0].mxu0
    %v624 = vadd.f32 0.0, %v623
    %v625 = vpop.f32.mrb[0].mxu0
    %626 = vmatprep.mubr.f32.mxu0 0.0
    %627 = vmatmul.mubr.f32.gmra.mrb[0].mxu0 %v196
    %v628 = vpop.f32.mrb[0].mxu0
    %v629 = vadd.f32 0.0, %v628
    %v630 = vpop.f32.mrb[0].mxu0
    %631 = vmatprep.mubr.f32.mxu0 0.0
    %632 = vmatmul.mubr.f32.gmra.mrb[0].mxu0 %v199
    %v633 = vpop.f32.mrb[0].mxu0
    %v634 = vadd.f32 0.0, %v633
    %v635 = vpop.f32.mrb[0].mxu0
    %636 = vmatprep.mubr.f32.mxu0 0.0
    %637 = vmatmul.mubr.f32.gmra.mrb[0].mxu0 %v202
    %v638 = vpop.f32.mrb[0].mxu0
    %v639 = vadd.f32 0.0, %v638
    %v640 = vpop.f32.mrb[0].mxu0
    %641 = vmatprep.mubr.f32.mxu0 0.0
    %642 = vmatmul.mubr.f32.gmra.mrb[0].mxu0 %v205
    %v643 = vpop.f32.mrb[0].mxu0
    %v644 = vadd.f32 0.0, %v643
    %v645 = vpop.f32.mrb[0].mxu0
    %646 = vmatprep.mubr.f32.mxu0 0.0
    %647 = vmatmul.mubr.f32.gmra.mrb[0].mxu0 %v208
    %v648 = vpop.f32.mrb[0].mxu0
    %v649 = vadd.f32 0.0, %v648
    %v650 = vpop.f32.mrb[0].mxu0
    %651 = vmatprep.mubr.f32.mxu0 0.0
    %652 = vmatmul.mubr.f32.gmra.mrb[0].mxu0 %v211
    %v653 = vpop.f32.mrb[0].mxu0
    %v654 = vadd.f32 0.0, %v653
    %v655 = vpop.f32.mrb[0].mxu0
    %656 = vmatprep.mubr.f32.mxu0 0.0
    %657 = vmatmul.mubr.f32.gmra.mrb[0].mxu0 %v214
    %v658 = vpop.f32.mrb[0].mxu0
    %v659 = vadd.f32 0.0, %v658
    %v660 = vpop.f32.mrb[0].mxu0
    %661 = vmatprep.mubr.f32.mxu0 0.0
    %662 = vmatmul.mubr.f32.gmra.mrb[0].mxu0 %v217
    %v663 = vpop.f32.mrb[0].mxu0
    %v664 = vadd.f32 0.0, %v663
    %v665 = vpop.f32.mrb[0].mxu0
    %666 = vmatprep.mubr.f32.mxu0 0.0
    %667 = vmatmul.mubr.f32.gmra.mrb[0].mxu0 %v220
    %v668 = vpop.f32.mrb[0].mxu0
    %v669 = vadd.f32 0.0, %v668
    %v670 = vpop.f32.mrb[0].mxu0
    %671 = vmatprep.mubr.f32.mxu0 0.0
    %672 = vmatmul.mubr.f32.gmra.mrb[0].mxu0 %v223
    %v673 = vpop.f32.mrb[0].mxu0
    %v674 = vadd.f32 0.0, %v673
    %v675 = vpop.f32.mrb[0].mxu0
    %676 = vmatprep.mubr.f32.mxu0 0.0
    %677 = vmatmul.mubr.f32.gmra.mrb[0].mxu0 %v226
    %v678 = vpop.f32.mrb[0].mxu0
    %v679 = vadd.f32 0.0, %v678
    %v680 = vpop.f32.mrb[0].mxu0
    %681 = vdwg.mxu0
    %682 = vmatprep.subr.mxu0 0.0
    %683 = vmatpush1.msra.mxu0 %v295
    %684 = vmatprep.subr.mxu0 0.0
    %685 = vmatpush1.msra.mxu0 %v300
    %686 = vmatprep.subr.mxu0 0.0
    %687 = vmatpush1.msra.mxu0 %v305
    %688 = vmatprep.subr.mxu0 0.0
    %689 = vmatpush1.msra.mxu0 %v310
    %690 = vmatprep.subr.mxu0 0.0
    %691 = vmatpush1.msra.mxu0 %v315
    %692 = vmatprep.subr.mxu0 0.0
    %693 = vmatpush1.msra.mxu0 %v320
    %694 = vmatprep.subr.mxu0 0.0
    %695 = vmatpush1.msra.mxu0 %v325
    %696 = vmatprep.subr.mxu0 0.0
    %697 = vmatpush1.msra.mxu0 %v330
    %698 = vmatprep.subr.mxu0 0.0
    %699 = vmatpush1.msra.mxu0 %v335
    %700 = vmatprep.subr.mxu0 0.0
    %701 = vmatpush1.msra.mxu0 %v340
    %702 = vmatprep.subr.mxu0 0.0
    %703 = vmatpush1.msra.mxu0 %v345
    %704 = vmatprep.subr.mxu0 0.0
    %705 = vmatpush1.msra.mxu0 %v350
    %706 = vmatprep.subr.mxu0 0.0
    %707 = vmatpush1.msra.mxu0 %v355
    %708 = vmatprep.subr.mxu0 0.0
    %709 = vmatpush1.msra.mxu0 %v360
    %710 = vmatprep.subr.mxu0 0.0
    %711 = vmatpush1.msra.mxu0 %v365
    %712 = vmatprep.subr.mxu0 0.0
    %713 = vmatpush1.msra.mxu0 %v370
    %714 = vmatprep.subr.mxu0 0.0
    %715 = vmatpush1.msra.mxu0 %v375
    %716 = vmatprep.subr.mxu0 0.0
    %717 = vmatpush1.msra.mxu0 %v380
    %718 = vmatprep.subr.mxu0 0.0
    %719 = vmatpush1.msra.mxu0 %v385
    %720 = vmatprep.subr.mxu0 0.0
    %721 = vmatpush1.msra.mxu0 %v390
    %722 = vmatprep.subr.mxu0 0.0
    %723 = vmatpush1.msra.mxu0 %v395
    %724 = vmatprep.subr.mxu0 0.0
    %725 = vmatpush1.msra.mxu0 %v400
    %726 = vmatprep.subr.mxu0 0.0
    %727 = vmatpush1.msra.mxu0 %v405
    %728 = vmatprep.subr.mxu0 0.0
    %729 = vmatpush1.msra.mxu0 %v410
    %730 = vmatprep.subr.mxu0 0.0
    %731 = vmatpush1.msra.mxu0 %v415
    %732 = vmatprep.subr.mxu0 0.0
    %733 = vmatpush1.msra.mxu0 %v420
    %734 = vmatprep.subr.mxu0 0.0
    %735 = vmatpush1.msra.mxu0 %v425
    %736 = vmatprep.subr.mxu0 0.0
    %737 = vmatpush1.msra.mxu0 %v430
    %738 = vmatprep.subr.mxu0 0.0
    %739 = vmatpush1.msra.mxu0 %v435
    %740 = vmatprep.subr.mxu0 0.0
    %741 = vmatpush1.msra.mxu0 %v440
    %742 = vmatprep.subr.mxu0 0.0
    %743 = vmatpush1.msra.mxu0 %v445
    %744 = vmatprep.subr.mxu0 0.0
    %745 = vmatpush1.msra.mxu0 %v450
    %746 = vmatprep.mubr.f32.mxu0 %v32
    %747 = vmatmul.mubr.f32.gmra.mrb[0].mxu0 %v31
    %v748 = vpop.f32.mrb[0].mxu0
    %v749 = vadd.f32 %v524, %v748
    %v750 = vpop.f32.mrb[0].mxu0
    %751 = vmatprep.mubr.f32.mxu0 %v34
    %752 = vmatmul.mubr.f32.gmra.mrb[0].mxu0 %v33
    %v753 = vpop.f32.mrb[0].mxu0
    %v754 = vadd.f32 %v529, %v753
    %v755 = vpop.f32.mrb[0].mxu0
    %756 = vmatprep.mubr.f32.mxu0 %v36
    %757 = vmatmul.mubr.f32.gmra.mrb[0].mxu0 %v35
    %v758 = vpop.f32.mrb[0].mxu0
    %v759 = vadd.f32 %v534, %v758
    %v760 = vpop.f32.mrb[0].mxu0
    %761 = vmatprep.mubr.f32.mxu0 %v38
    %762 = vmatmul.mubr.f32.gmra.mrb[0].mxu0 %v37
    %v763 = vpop.f32.mrb[0].mxu0
    %v764 = vadd.f32 %v539, %v763
    %v765 = vpop.f32.mrb[0].mxu0
    %766 = vmatprep.mubr.f32.mxu0 %v40
    %767 = vmatmul.mubr.f32.gmra.mrb[0].mxu0 %v39
    %v768 = vpop.f32.mrb[0].mxu0
    %v769 = vadd.f32 %v544, %v768
    %v770 = vpop.f32.mrb[0].mxu0
    %771 = vmatprep.mubr.f32.mxu0 %v42
    %772 = vmatmul.mubr.f32.gmra.mrb[0].mxu0 %v41
    %v773 = vpop.f32.mrb[0].mxu0
    %v774 = vadd.f32 %v549, %v773
    %v775 = vpop.f32.mrb[0].mxu0
    %776 = vmatprep.mubr.f32.mxu0 %v44
    %777 = vmatmul.mubr.f32.gmra.mrb[0].mxu0 %v43
    %v778 = vpop.f32.mrb[0].mxu0
    %v779 = vadd.f32 %v554, %v778
    %v780 = vpop.f32.mrb[0].mxu0
    %781 = vmatprep.mubr.f32.mxu0 %v46
    %782 = vmatmul.mubr.f32.gmra.mrb[0].mxu0 %v45
    %v783 = vpop.f32.mrb[0].mxu0
    %v784 = vadd.f32 %v559, %v783
    %v785 = vpop.f32.mrb[0].mxu0
    %786 = vmatprep.mubr.f32.mxu0 %v48
    %787 = vmatmul.mubr.f32.gmra.mrb[0].mxu0 %v47
    %v788 = vpop.f32.mrb[0].mxu0
    %v789 = vadd.f32 %v564, %v788
    %v790 = vpop.f32.mrb[0].mxu0
    %791 = vmatprep.mubr.f32.mxu0 %v50
    %792 = vmatmul.mubr.f32.gmra.mrb[0].mxu0 %v49
    %v793 = vpop.f32.mrb[0].mxu0
    %v794 = vadd.f32 %v569, %v793
    %v795 = vpop.f32.mrb[0].mxu0
    %796 = vmatprep.mubr.f32.mxu0 %v52
    %797 = vmatmul.mubr.f32.gmra.mrb[0].mxu0 %v51
    %v798 = vpop.f32.mrb[0].mxu0
    %v799 = vadd.f32 %v574, %v798
    %v800 = vpop.f32.mrb[0].mxu0
    %801 = vmatprep.mubr.f32.mxu0 %v54
    %802 = vmatmul.mubr.f32.gmra.mrb[0].mxu0 %v53
    %v803 = vpop.f32.mrb[0].mxu0
    %v804 = vadd.f32 %v579, %v803
    %v805 = vpop.f32.mrb[0].mxu0
    %806 = vmatprep.mubr.f32.mxu0 %v56
    %807 = vmatmul.mubr.f32.gmra.mrb[0].mxu0 %v55
    %v808 = vpop.f32.mrb[0].mxu0
    %v809 = vadd.f32 %v584, %v808
    %v810 = vpop.f32.mrb[0].mxu0
    %811 = vmatprep.mubr.f32.mxu0 %v58
    %812 = vmatmul.mubr.f32.gmra.mrb[0].mxu0 %v57
    %v813 = vpop.f32.mrb[0].mxu0
    %v814 = vadd.f32 %v589, %v813
    %v815 = vpop.f32.mrb[0].mxu0
    %816 = vmatprep.mubr.f32.mxu0 %v60
    %817 = vmatmul.mubr.f32.gmra.mrb[0].mxu0 %v59
    %v818 = vpop.f32.mrb[0].mxu0
    %v819 = vadd.f32 %v594, %v818
    %v820 = vpop.f32.mrb[0].mxu0
    %821 = vmatprep.mubr.f32.mxu0 %v62
    %822 = vmatmul.mubr.f32.gmra.mrb[0].mxu0 %v61
    %v823 = vpop.f32.mrb[0].mxu0
    %v824 = vadd.f32 %v599, %v823
    %v825 = vpop.f32.mrb[0].mxu0
    %826 = vmatprep.mubr.f32.mxu0 %v64
    %827 = vmatmul.mubr.f32.gmra.mrb[0].mxu0 %v63
    %v828 = vpop.f32.mrb[0].mxu0
    %v829 = vadd.f32 %v604, %v828
    %v830 = vpop.f32.mrb[0].mxu0
    %831 = vmatprep.mubr.f32.mxu0 %v66
    %832 = vmatmul.mubr.f32.gmra.mrb[0].mxu0 %v65
    %v833 = vpop.f32.mrb[0].mxu0
    %v834 = vadd.f32 %v609, %v833
    %v835 = vpop.f32.mrb[0].mxu0
    %836 = vmatprep.mubr.f32.mxu0 %v68
    %837 = vmatmul.mubr.f32.gmra.mrb[0].mxu0 %v67
    %v838 = vpop.f32.mrb[0].mxu0
    %v839 = vadd.f32 %v614, %v838
    %v840 = vpop.f32.mrb[0].mxu0
    %841 = vmatprep.mubr.f32.mxu0 %v70
    %842 = vmatmul.mubr.f32.gmra.mrb[0].mxu0 %v69
    %v843 = vpop.f32.mrb[0].mxu0
    %v844 = vadd.f32 %v619, %v843
    %v845 = vpop.f32.mrb[0].mxu0
    %846 = vmatprep.mubr.f32.mxu0 %v72
    %847 = vmatmul.mubr.f32.gmra.mrb[0].mxu0 %v71
    %v848 = vpop.f32.mrb[0].mxu0
    %v849 = vadd.f32 %v624, %v848
    %v850 = vpop.f32.mrb[0].mxu0
    %851 = vmatprep.mubr.f32.mxu0 %v74
    %852 = vmatmul.mubr.f32.gmra.mrb[0].mxu0 %v73
    %v853 = vpop.f32.mrb[0].mxu0
    %v854 = vadd.f32 %v629, %v853
    %v855 = vpop.f32.mrb[0].mxu0
    %856 = vmatprep.mubr.f32.mxu0 %v76
    %857 = vmatmul.mubr.f32.gmra.mrb[0].mxu0 %v75
    %v858 = vpop.f32.mrb[0].mxu0
    %v859 = vadd.f32 %v634, %v858
    %v860 = vpop.f32.mrb[0].mxu0
    %861 = vmatprep.mubr.f32.mxu0 %v78
    %862 = vmatmul.mubr.f32.gmra.mrb[0].mxu0 %v77
    %v863 = vpop.f32.mrb[0].mxu0
    %v864 = vadd.f32 %v639, %v863
    %v865 = vpop.f32.mrb[0].mxu0
    %866 = vmatprep.mubr.f32.mxu0 %v80
    %867 = vmatmul.mubr.f32.gmra.mrb[0].mxu0 %v79
    %v868 = vpop.f32.mrb[0].mxu0
    %v869 = vadd.f32 %v644, %v868
    %v870 = vpop.f32.mrb[0].mxu0
    %871 = vmatprep.mubr.f32.mxu0 %v82
    %872 = vmatmul.mubr.f32.gmra.mrb[0].mxu0 %v81
    %v873 = vpop.f32.mrb[0].mxu0
    %v874 = vadd.f32 %v649, %v873
    %v875 = vpop.f32.mrb[0].mxu0
    %876 = vmatprep.mubr.f32.mxu0 %v84
    %877 = vmatmul.mubr.f32.gmra.mrb[0].mxu0 %v83
    %v878 = vpop.f32.mrb[0].mxu0
    %v879 = vadd.f32 %v654, %v878
    %v880 = vpop.f32.mrb[0].mxu0
    %881 = vmatprep.mubr.f32.mxu0 %v86
    %882 = vmatmul.mubr.f32.gmra.mrb[0].mxu0 %v85
    %v883 = vpop.f32.mrb[0].mxu0
    %v884 = vadd.f32 %v659, %v883
    %v885 = vpop.f32.mrb[0].mxu0
    %886 = vmatprep.mubr.f32.mxu0 %v88
    %887 = vmatmul.mubr.f32.gmra.mrb[0].mxu0 %v87
    %v888 = vpop.f32.mrb[0].mxu0
    %v889 = vadd.f32 %v664, %v888
    %v890 = vpop.f32.mrb[0].mxu0
    %891 = vmatprep.mubr.f32.mxu0 %v90
    %892 = vmatmul.mubr.f32.gmra.mrb[0].mxu0 %v89
    %v893 = vpop.f32.mrb[0].mxu0
    %v894 = vadd.f32 %v669, %v893
    %v895 = vpop.f32.mrb[0].mxu0
    %896 = vmatprep.mubr.f32.mxu0 %v92
    %897 = vmatmul.mubr.f32.gmra.mrb[0].mxu0 %v91
    %v898 = vpop.f32.mrb[0].mxu0
    %v899 = vadd.f32 %v674, %v898
    %v900 = vpop.f32.mrb[0].mxu0
    %901 = vmatprep.mubr.f32.mxu0 %v94
    %902 = vmatmul.mubr.f32.gmra.mrb[0].mxu0 %v93
    %v903 = vpop.f32.mrb[0].mxu0
    %v904 = vadd.f32 %v679, %v903
    %v905 = vpop.f32.mrb[0].mxu0
    %906 = vdwg.mxu0
    %v907 = vtanh.pop %v749
    %v908 = vtanh.pop %v754
    %v909 = vtanh.pop %v759
    %v910 = vtanh.pop %v764
    %v911 = vtanh.pop %v769
    %v912 = vtanh.pop %v774
    %v913 = vtanh.pop %v779
    %v914 = vtanh.pop %v784
    %v915 = vtanh.pop %v789
    %v916 = vtanh.pop %v794
    %v917 = vtanh.pop %v799
    %v918 = vtanh.pop %v804
    %v919 = vtanh.pop %v809
    %v920 = vtanh.pop %v814
    %v921 = vtanh.pop %v819
    %v922 = vtanh.pop %v824
    %v923 = vtanh.pop %v829
    %v924 = vtanh.pop %v834
    %v925 = vtanh.pop %v839
    %v926 = vtanh.pop %v844
    %v927 = vtanh.pop %v849
    %v928 = vtanh.pop %v854
    %v929 = vtanh.pop %v859
    %v930 = vtanh.pop %v864
    %v931 = vtanh.pop %v869
    %v932 = vtanh.pop %v874
    %v933 = vtanh.pop %v879
    %v934 = vtanh.pop %v884
    %v935 = vtanh.pop %v889
    %v936 = vtanh.pop %v894
    %v937 = vtanh.pop %v899
    %v938 = vtanh.pop %v904
    %s939 = scalar_lea.vmem %s2, 32
    %v940 = vld [vmem:[%s939] sm:$0xff]
    %v941 = vld [vmem:[%s939 + $0x8] sm:$0xff]
    %v942 = vld [vmem:[%s939 + $0x10] sm:$0xff]
    %v943 = vld [vmem:[%s939 + $0x18] sm:$0xff]
    %v945 = vsel %vm131, %v907, 0
    %v948 = vsel %vm131, %v908, 0
    %v951 = vsel %vm131, %v909, 0
    %v954 = vsel %vm131, %v910, 0
    %v957 = vsel %vm131, %v911, 0
    %v960 = vsel %vm131, %v912, 0
    %v963 = vsel %vm131, %v913, 0
    %v966 = vsel %vm131, %v914, 0
    %v969 = vsel %vm131, %v915, 0
    %v972 = vsel %vm131, %v916, 0
    %v975 = vsel %vm131, %v917, 0
    %v978 = vsel %vm131, %v918, 0
    %v981 = vsel %vm131, %v919, 0
    %v984 = vsel %vm131, %v920, 0
    %v987 = vsel %vm131, %v921, 0
    %v990 = vsel %vm131, %v922, 0
    %v993 = vsel %vm131, %v923, 0
    %v996 = vsel %vm131, %v924, 0
    %v999 = vsel %vm131, %v925, 0
    %v1002 = vsel %vm131, %v926, 0
    %v1005 = vsel %vm131, %v927, 0
    %v1008 = vsel %vm131, %v928, 0
    %v1011 = vsel %vm131, %v929, 0
    %v1014 = vsel %vm131, %v930, 0
    %v1017 = vsel %vm131, %v931, 0
    %v1020 = vsel %vm131, %v932, 0
    %v1023 = vsel %vm131, %v933, 0
    %v1026 = vsel %vm131, %v934, 0
    %v1029 = vsel %vm131, %v935, 0
    %v1032 = vsel %vm131, %v936, 0
    %v1035 = vsel %vm131, %v937, 0
    %v1038 = vsel %vm131, %v938, 0
    %1040 = vmatprep.subr.mxu0 0.0
    %1041 = vmatpush1.msra.mxu0 %v940
    %1042 = vmatprep.subr.mxu0 0.0
    %1043 = vmatpush1.msra.mxu0 %v941
    %1044 = vmatprep.subr.mxu0 0.0
    %1045 = vmatpush1.msra.mxu0 %v942
    %1046 = vmatprep.subr.mxu0 0.0
    %1047 = vmatpush1.msra.mxu0 %v943
    %1048 = vmatprep.subr.mxu0 0.0
    %1049 = vmatpush1.msra.mxu0 0.0
    %1050 = vmatprep.subr.mxu0 0.0
    %1051 = vmatpush1.msra.mxu0 0.0
    %1052 = vmatprep.subr.mxu0 0.0
    %1053 = vmatpush1.msra.mxu0 0.0
    %1054 = vmatprep.subr.mxu0 0.0
    %1055 = vmatpush1.msra.mxu0 0.0
    %1056 = vmatprep.subr.mxu0 0.0
    %1057 = vmatpush1.msra.mxu0 0.0
    %1058 = vmatprep.subr.mxu0 0.0
    %1059 = vmatpush1.msra.mxu0 0.0
    %1060 = vmatprep.subr.mxu0 0.0
    %1061 = vmatpush1.msra.mxu0 0.0
    %1062 = vmatprep.subr.mxu0 0.0
    %1063 = vmatpush1.msra.mxu0 0.0
    %1064 = vmatprep.subr.mxu0 0.0
    %1065 = vmatpush1.msra.mxu0 0.0
    %1066 = vmatprep.subr.mxu0 0.0
    %1067 = vmatpush1.msra.mxu0 0.0
    %1068 = vmatprep.subr.mxu0 0.0
    %1069 = vmatpush1.msra.mxu0 0.0
    %1070 = vmatprep.subr.mxu0 0.0
    %1071 = vmatpush1.msra.mxu0 0.0
    %1072 = vmatprep.subr.mxu0 0.0
    %1073 = vmatpush1.msra.mxu0 0.0
    %1074 = vmatprep.subr.mxu0 0.0
    %1075 = vmatpush1.msra.mxu0 0.0
    %1076 = vmatprep.subr.mxu0 0.0
    %1077 = vmatpush1.msra.mxu0 0.0
    %1078 = vmatprep.subr.mxu0 0.0
    %1079 = vmatpush1.msra.mxu0 0.0
    %1080 = vmatprep.subr.mxu0 0.0
    %1081 = vmatpush1.msra.mxu0 0.0
    %1082 = vmatprep.subr.mxu0 0.0
    %1083 = vmatpush1.msra.mxu0 0.0
    %1084 = vmatprep.subr.mxu0 0.0
    %1085 = vmatpush1.msra.mxu0 0.0
    %1086 = vmatprep.subr.mxu0 0.0
    %1087 = vmatpush1.msra.mxu0 0.0
    %1088 = vmatprep.subr.mxu0 0.0
    %1089 = vmatpush1.msra.mxu0 0.0
    %1090 = vmatprep.subr.mxu0 0.0
    %1091 = vmatpush1.msra.mxu0 0.0
    %1092 = vmatprep.subr.mxu0 0.0
    %1093 = vmatpush1.msra.mxu0 0.0
    %1094 = vmatprep.subr.mxu0 0.0
    %1095 = vmatpush1.msra.mxu0 0.0
    %1096 = vmatprep.subr.mxu0 0.0
    %1097 = vmatpush1.msra.mxu0 0.0
    %1098 = vmatprep.subr.mxu0 0.0
    %1099 = vmatpush1.msra.mxu0 0.0
    %1100 = vmatprep.subr.mxu0 0.0
    %1101 = vmatpush1.msra.mxu0 0.0
    %1102 = vmatprep.subr.mxu0 0.0
    %1103 = vmatpush1.msra.mxu0 0.0
    %1104 = vmatprep.mubr.f32.mxu0 0.0
    %1105 = vmatmul.mubr.f32.gmra.mrb[0].mxu0 %v945
    %v1106 = vpop.f32.mrb[0].mxu0
    %v1107 = vadd.f32 0.0, %v1106
    %v1108 = vpop.f32.mrb[0].mxu0
    %1109 = vmatprep.mubr.f32.mxu0 0.0
    %1110 = vmatmul.mubr.f32.gmra.mrb[0].mxu0 %v948
    %v1111 = vpop.f32.mrb[0].mxu0
    %v1112 = vadd.f32 0.0, %v1111
    %v1113 = vpop.f32.mrb[0].mxu0
    %1114 = vmatprep.mubr.f32.mxu0 0.0
    %1115 = vmatmul.mubr.f32.gmra.mrb[0].mxu0 %v951
    %v1116 = vpop.f32.mrb[0].mxu0
    %v1117 = vadd.f32 0.0, %v1116
    %v1118 = vpop.f32.mrb[0].mxu0
    %1119 = vmatprep.mubr.f32.mxu0 0.0
    %1120 = vmatmul.mubr.f32.gmra.mrb[0].mxu0 %v954
    %v1121 = vpop.f32.mrb[0].mxu0
    %v1122 = vadd.f32 0.0, %v1121
    %v1123 = vpop.f32.mrb[0].mxu0
    %1124 = vmatprep.mubr.f32.mxu0 0.0
    %1125 = vmatmul.mubr.f32.gmra.mrb[0].mxu0 %v957
    %v1126 = vpop.f32.mrb[0].mxu0
    %v1127 = vadd.f32 0.0, %v1126
    %v1128 = vpop.f32.mrb[0].mxu0
    %1129 = vmatprep.mubr.f32.mxu0 0.0
    %1130 = vmatmul.mubr.f32.gmra.mrb[0].mxu0 %v960
    %v1131 = vpop.f32.mrb[0].mxu0
    %v1132 = vadd.f32 0.0, %v1131
    %v1133 = vpop.f32.mrb[0].mxu0
    %1134 = vmatprep.mubr.f32.mxu0 0.0
    %1135 = vmatmul.mubr.f32.gmra.mrb[0].mxu0 %v963
    %v1136 = vpop.f32.mrb[0].mxu0
    %v1137 = vadd.f32 0.0, %v1136
    %v1138 = vpop.f32.mrb[0].mxu0
    %1139 = vmatprep.mubr.f32.mxu0 0.0
    %1140 = vmatmul.mubr.f32.gmra.mrb[0].mxu0 %v966
    %v1141 = vpop.f32.mrb[0].mxu0
    %v1142 = vadd.f32 0.0, %v1141
    %v1143 = vpop.f32.mrb[0].mxu0
    %1144 = vmatprep.mubr.f32.mxu0 0.0
    %1145 = vmatmul.mubr.f32.gmra.mrb[0].mxu0 %v969
    %v1146 = vpop.f32.mrb[0].mxu0
    %v1147 = vadd.f32 0.0, %v1146
    %v1148 = vpop.f32.mrb[0].mxu0
    %1149 = vmatprep.mubr.f32.mxu0 0.0
    %1150 = vmatmul.mubr.f32.gmra.mrb[0].mxu0 %v972
    %v1151 = vpop.f32.mrb[0].mxu0
    %v1152 = vadd.f32 0.0, %v1151
    %v1153 = vpop.f32.mrb[0].mxu0
    %1154 = vmatprep.mubr.f32.mxu0 0.0
    %1155 = vmatmul.mubr.f32.gmra.mrb[0].mxu0 %v975
    %v1156 = vpop.f32.mrb[0].mxu0
    %v1157 = vadd.f32 0.0, %v1156
    %v1158 = vpop.f32.mrb[0].mxu0
    %1159 = vmatprep.mubr.f32.mxu0 0.0
    %1160 = vmatmul.mubr.f32.gmra.mrb[0].mxu0 %v978
    %v1161 = vpop.f32.mrb[0].mxu0
    %v1162 = vadd.f32 0.0, %v1161
    %v1163 = vpop.f32.mrb[0].mxu0
    %1164 = vmatprep.mubr.f32.mxu0 0.0
    %1165 = vmatmul.mubr.f32.gmra.mrb[0].mxu0 %v981
    %v1166 = vpop.f32.mrb[0].mxu0
    %v1167 = vadd.f32 0.0, %v1166
    %v1168 = vpop.f32.mrb[0].mxu0
    %1169 = vmatprep.mubr.f32.mxu0 0.0
    %1170 = vmatmul.mubr.f32.gmra.mrb[0].mxu0 %v984
    %v1171 = vpop.f32.mrb[0].mxu0
    %v1172 = vadd.f32 0.0, %v1171
    %v1173 = vpop.f32.mrb[0].mxu0
    %1174 = vmatprep.mubr.f32.mxu0 0.0
    %1175 = vmatmul.mubr.f32.gmra.mrb[0].mxu0 %v987
    %v1176 = vpop.f32.mrb[0].mxu0
    %v1177 = vadd.f32 0.0, %v1176
    %v1178 = vpop.f32.mrb[0].mxu0
    %1179 = vmatprep.mubr.f32.mxu0 0.0
    %1180 = vmatmul.mubr.f32.gmra.mrb[0].mxu0 %v990
    %v1181 = vpop.f32.mrb[0].mxu0
    %v1182 = vadd.f32 0.0, %v1181
    %v1183 = vpop.f32.mrb[0].mxu0
    %1184 = vmatprep.mubr.f32.mxu0 0.0
    %1185 = vmatmul.mubr.f32.gmra.mrb[0].mxu0 %v993
    %v1186 = vpop.f32.mrb[0].mxu0
    %v1187 = vadd.f32 0.0, %v1186
    %v1188 = vpop.f32.mrb[0].mxu0
    %1189 = vmatprep.mubr.f32.mxu0 0.0
    %1190 = vmatmul.mubr.f32.gmra.mrb[0].mxu0 %v996
    %v1191 = vpop.f32.mrb[0].mxu0
    %v1192 = vadd.f32 0.0, %v1191
    %v1193 = vpop.f32.mrb[0].mxu0
    %1194 = vmatprep.mubr.f32.mxu0 0.0
    %1195 = vmatmul.mubr.f32.gmra.mrb[0].mxu0 %v999
    %v1196 = vpop.f32.mrb[0].mxu0
    %v1197 = vadd.f32 0.0, %v1196
    %v1198 = vpop.f32.mrb[0].mxu0
    %1199 = vmatprep.mubr.f32.mxu0 0.0
    %1200 = vmatmul.mubr.f32.gmra.mrb[0].mxu0 %v1002
    %v1201 = vpop.f32.mrb[0].mxu0
    %v1202 = vadd.f32 0.0, %v1201
    %v1203 = vpop.f32.mrb[0].mxu0
    %1204 = vmatprep.mubr.f32.mxu0 0.0
    %1205 = vmatmul.mubr.f32.gmra.mrb[0].mxu0 %v1005
    %v1206 = vpop.f32.mrb[0].mxu0
    %v1207 = vadd.f32 0.0, %v1206
    %v1208 = vpop.f32.mrb[0].mxu0
    %1209 = vmatprep.mubr.f32.mxu0 0.0
    %1210 = vmatmul.mubr.f32.gmra.mrb[0].mxu0 %v1008
    %v1211 = vpop.f32.mrb[0].mxu0
    %v1212 = vadd.f32 0.0, %v1211
    %v1213 = vpop.f32.mrb[0].mxu0
    %1214 = vmatprep.mubr.f32.mxu0 0.0
    %1215 = vmatmul.mubr.f32.gmra.mrb[0].mxu0 %v1011
    %v1216 = vpop.f32.mrb[0].mxu0
    %v1217 = vadd.f32 0.0, %v1216
    %v1218 = vpop.f32.mrb[0].mxu0
    %1219 = vmatprep.mubr.f32.mxu0 0.0
    %1220 = vmatmul.mubr.f32.gmra.mrb[0].mxu0 %v1014
    %v1221 = vpop.f32.mrb[0].mxu0
    %v1222 = vadd.f32 0.0, %v1221
    %v1223 = vpop.f32.mrb[0].mxu0
    %1224 = vmatprep.mubr.f32.mxu0 0.0
    %1225 = vmatmul.mubr.f32.gmra.mrb[0].mxu0 %v1017
    %v1226 = vpop.f32.mrb[0].mxu0
    %v1227 = vadd.f32 0.0, %v1226
    %v1228 = vpop.f32.mrb[0].mxu0
    %1229 = vmatprep.mubr.f32.mxu0 0.0
    %1230 = vmatmul.mubr.f32.gmra.mrb[0].mxu0 %v1020
    %v1231 = vpop.f32.mrb[0].mxu0
    %v1232 = vadd.f32 0.0, %v1231
    %v1233 = vpop.f32.mrb[0].mxu0
    %1234 = vmatprep.mubr.f32.mxu0 0.0
    %1235 = vmatmul.mubr.f32.gmra.mrb[0].mxu0 %v1023
    %v1236 = vpop.f32.mrb[0].mxu0
    %v1237 = vadd.f32 0.0, %v1236
    %v1238 = vpop.f32.mrb[0].mxu0
    %1239 = vmatprep.mubr.f32.mxu0 0.0
    %1240 = vmatmul.mubr.f32.gmra.mrb[0].mxu0 %v1026
    %v1241 = vpop.f32.mrb[0].mxu0
    %v1242 = vadd.f32 0.0, %v1241
    %v1243 = vpop.f32.mrb[0].mxu0
    %1244 = vmatprep.mubr.f32.mxu0 0.0
    %1245 = vmatmul.mubr.f32.gmra.mrb[0].mxu0 %v1029
    %v1246 = vpop.f32.mrb[0].mxu0
    %v1247 = vadd.f32 0.0, %v1246
    %v1248 = vpop.f32.mrb[0].mxu0
    %1249 = vmatprep.mubr.f32.mxu0 0.0
    %1250 = vmatmul.mubr.f32.gmra.mrb[0].mxu0 %v1032
    %v1251 = vpop.f32.mrb[0].mxu0
    %v1252 = vadd.f32 0.0, %v1251
    %v1253 = vpop.f32.mrb[0].mxu0
    %1254 = vmatprep.mubr.f32.mxu0 0.0
    %1255 = vmatmul.mubr.f32.gmra.mrb[0].mxu0 %v1035
    %v1256 = vpop.f32.mrb[0].mxu0
    %v1257 = vadd.f32 0.0, %v1256
    %v1258 = vpop.f32.mrb[0].mxu0
    %1259 = vmatprep.mubr.f32.mxu0 0.0
    %1260 = vmatmul.mubr.f32.gmra.mrb[0].mxu0 %v1038
    %v1261 = vpop.f32.mrb[0].mxu0
    %v1262 = vadd.f32 0.0, %v1261
    %v1263 = vpop.f32.mrb[0].mxu0
    %1264 = vdwg.mxu0
    %s1265 = scalar_lea.vmem %s3, 32
    %v1266 = vld [vmem:[%s1265] sm:$0xff]
    %v1267 = vld [vmem:[%s1265 + $0x8] sm:$0xff]
    %v1268 = vld [vmem:[%s1265 + $0x10] sm:$0xff]
    %v1269 = vld [vmem:[%s1265 + $0x18] sm:$0xff]
    %1270 = vmatprep.subr.mxu0 0.0
    %1271 = vmatpush1.msra.mxu0 %v1266
    %1272 = vmatprep.subr.mxu0 0.0
    %1273 = vmatpush1.msra.mxu0 %v1267
    %1274 = vmatprep.subr.mxu0 0.0
    %1275 = vmatpush1.msra.mxu0 %v1268
    %1276 = vmatprep.subr.mxu0 0.0
    %1277 = vmatpush1.msra.mxu0 %v1269
    %1278 = vmatprep.subr.mxu0 0.0
    %1279 = vmatpush1.msra.mxu0 0.0
    %1280 = vmatprep.subr.mxu0 0.0
    %1281 = vmatpush1.msra.mxu0 0.0
    %1282 = vmatprep.subr.mxu0 0.0
    %1283 = vmatpush1.msra.mxu0 0.0
    %1284 = vmatprep.subr.mxu0 0.0
    %1285 = vmatpush1.msra.mxu0 0.0
    %1286 = vmatprep.subr.mxu0 0.0
    %1287 = vmatpush1.msra.mxu0 0.0
    %1288 = vmatprep.subr.mxu0 0.0
    %1289 = vmatpush1.msra.mxu0 0.0
    %1290 = vmatprep.subr.mxu0 0.0
    %1291 = vmatpush1.msra.mxu0 0.0
    %1292 = vmatprep.subr.mxu0 0.0
    %1293 = vmatpush1.msra.mxu0 0.0
    %1294 = vmatprep.subr.mxu0 0.0
    %1295 = vmatpush1.msra.mxu0 0.0
    %1296 = vmatprep.subr.mxu0 0.0
    %1297 = vmatpush1.msra.mxu0 0.0
    %1298 = vmatprep.subr.mxu0 0.0
    %1299 = vmatpush1.msra.mxu0 0.0
    %1300 = vmatprep.subr.mxu0 0.0
    %1301 = vmatpush1.msra.mxu0 0.0
    %1302 = vmatprep.subr.mxu0 0.0
    %1303 = vmatpush1.msra.mxu0 0.0
    %1304 = vmatprep.subr.mxu0 0.0
    %1305 = vmatpush1.msra.mxu0 0.0
    %1306 = vmatprep.subr.mxu0 0.0
    %1307 = vmatpush1.msra.mxu0 0.0
    %1308 = vmatprep.subr.mxu0 0.0
    %1309 = vmatpush1.msra.mxu0 0.0
    %1310 = vmatprep.subr.mxu0 0.0
    %1311 = vmatpush1.msra.mxu0 0.0
    %1312 = vmatprep.subr.mxu0 0.0
    %1313 = vmatpush1.msra.mxu0 0.0
    %1314 = vmatprep.subr.mxu0 0.0
    %1315 = vmatpush1.msra.mxu0 0.0
    %1316 = vmatprep.subr.mxu0 0.0
    %1317 = vmatpush1.msra.mxu0 0.0
    %1318 = vmatprep.subr.mxu0 0.0
    %1319 = vmatpush1.msra.mxu0 0.0
    %1320 = vmatprep.subr.mxu0 0.0
    %1321 = vmatpush1.msra.mxu0 0.0
    %1322 = vmatprep.subr.mxu0 0.0
    %1323 = vmatpush1.msra.mxu0 0.0
    %1324 = vmatprep.subr.mxu0 0.0
    %1325 = vmatpush1.msra.mxu0 0.0
    %1326 = vmatprep.subr.mxu0 0.0
    %1327 = vmatpush1.msra.mxu0 0.0
    %1328 = vmatprep.subr.mxu0 0.0
    %1329 = vmatpush1.msra.mxu0 0.0
    %1330 = vmatprep.subr.mxu0 0.0
    %1331 = vmatpush1.msra.mxu0 0.0
    %1332 = vmatprep.subr.mxu0 0.0
    %1333 = vmatpush1.msra.mxu0 0.0
    %1334 = vmatprep.mubr.f32.mxu0 0.0
    %1335 = vmatmul.mubr.f32.gmra.mrb[0].mxu0 %v945
    %v1336 = vpop.f32.mrb[0].mxu0
    %v1337 = vadd.f32 0.0, %v1336
    %v1338 = vpop.f32.mrb[0].mxu0
    %1339 = vmatprep.mubr.f32.mxu0 0.0
    %1340 = vmatmul.mubr.f32.gmra.mrb[0].mxu0 %v948
    %v1341 = vpop.f32.mrb[0].mxu0
    %v1342 = vadd.f32 0.0, %v1341
    %v1343 = vpop.f32.mrb[0].mxu0
    %1344 = vmatprep.mubr.f32.mxu0 0.0
    %1345 = vmatmul.mubr.f32.gmra.mrb[0].mxu0 %v951
    %v1346 = vpop.f32.mrb[0].mxu0
    %v1347 = vadd.f32 0.0, %v1346
    %v1348 = vpop.f32.mrb[0].mxu0
    %1349 = vmatprep.mubr.f32.mxu0 0.0
    %1350 = vmatmul.mubr.f32.gmra.mrb[0].mxu0 %v954
    %v1351 = vpop.f32.mrb[0].mxu0
    %v1352 = vadd.f32 0.0, %v1351
    %v1353 = vpop.f32.mrb[0].mxu0
    %1354 = vmatprep.mubr.f32.mxu0 0.0
    %1355 = vmatmul.mubr.f32.gmra.mrb[0].mxu0 %v957
    %v1356 = vpop.f32.mrb[0].mxu0
    %v1357 = vadd.f32 0.0, %v1356
    %v1358 = vpop.f32.mrb[0].mxu0
    %1359 = vmatprep.mubr.f32.mxu0 0.0
    %1360 = vmatmul.mubr.f32.gmra.mrb[0].mxu0 %v960
    %v1361 = vpop.f32.mrb[0].mxu0
    %v1362 = vadd.f32 0.0, %v1361
    %v1363 = vpop.f32.mrb[0].mxu0
    %1364 = vmatprep.mubr.f32.mxu0 0.0
    %1365 = vmatmul.mubr.f32.gmra.mrb[0].mxu0 %v963
    %v1366 = vpop.f32.mrb[0].mxu0
    %v1367 = vadd.f32 0.0, %v1366
    %v1368 = vpop.f32.mrb[0].mxu0
    %1369 = vmatprep.mubr.f32.mxu0 0.0
    %1370 = vmatmul.mubr.f32.gmra.mrb[0].mxu0 %v966
    %v1371 = vpop.f32.mrb[0].mxu0
    %v1372 = vadd.f32 0.0, %v1371
    %v1373 = vpop.f32.mrb[0].mxu0
    %1374 = vmatprep.mubr.f32.mxu0 0.0
    %1375 = vmatmul.mubr.f32.gmra.mrb[0].mxu0 %v969
    %v1376 = vpop.f32.mrb[0].mxu0
    %v1377 = vadd.f32 0.0, %v1376
    %v1378 = vpop.f32.mrb[0].mxu0
    %1379 = vmatprep.mubr.f32.mxu0 0.0
    %1380 = vmatmul.mubr.f32.gmra.mrb[0].mxu0 %v972
    %v1381 = vpop.f32.mrb[0].mxu0
    %v1382 = vadd.f32 0.0, %v1381
    %v1383 = vpop.f32.mrb[0].mxu0
    %1384 = vmatprep.mubr.f32.mxu0 0.0
    %1385 = vmatmul.mubr.f32.gmra.mrb[0].mxu0 %v975
    %v1386 = vpop.f32.mrb[0].mxu0
    %v1387 = vadd.f32 0.0, %v1386
    %v1388 = vpop.f32.mrb[0].mxu0
    %1389 = vmatprep.mubr.f32.mxu0 0.0
    %1390 = vmatmul.mubr.f32.gmra.mrb[0].mxu0 %v978
    %v1391 = vpop.f32.mrb[0].mxu0
    %v1392 = vadd.f32 0.0, %v1391
    %v1393 = vpop.f32.mrb[0].mxu0
    %1394 = vmatprep.mubr.f32.mxu0 0.0
    %1395 = vmatmul.mubr.f32.gmra.mrb[0].mxu0 %v981
    %v1396 = vpop.f32.mrb[0].mxu0
    %v1397 = vadd.f32 0.0, %v1396
    %v1398 = vpop.f32.mrb[0].mxu0
    %1399 = vmatprep.mubr.f32.mxu0 0.0
    %1400 = vmatmul.mubr.f32.gmra.mrb[0].mxu0 %v984
    %v1401 = vpop.f32.mrb[0].mxu0
    %v1402 = vadd.f32 0.0, %v1401
    %v1403 = vpop.f32.mrb[0].mxu0
    %1404 = vmatprep.mubr.f32.mxu0 0.0
    %1405 = vmatmul.mubr.f32.gmra.mrb[0].mxu0 %v987
    %v1406 = vpop.f32.mrb[0].mxu0
    %v1407 = vadd.f32 0.0, %v1406
    %v1408 = vpop.f32.mrb[0].mxu0
    %1409 = vmatprep.mubr.f32.mxu0 0.0
    %1410 = vmatmul.mubr.f32.gmra.mrb[0].mxu0 %v990
    %v1411 = vpop.f32.mrb[0].mxu0
    %v1412 = vadd.f32 0.0, %v1411
    %v1413 = vpop.f32.mrb[0].mxu0
    %1414 = vmatprep.mubr.f32.mxu0 0.0
    %1415 = vmatmul.mubr.f32.gmra.mrb[0].mxu0 %v993
    %v1416 = vpop.f32.mrb[0].mxu0
    %v1417 = vadd.f32 0.0, %v1416
    %v1418 = vpop.f32.mrb[0].mxu0
    %1419 = vmatprep.mubr.f32.mxu0 0.0
    %1420 = vmatmul.mubr.f32.gmra.mrb[0].mxu0 %v996
    %v1421 = vpop.f32.mrb[0].mxu0
    %v1422 = vadd.f32 0.0, %v1421
    %v1423 = vpop.f32.mrb[0].mxu0
    %1424 = vmatprep.mubr.f32.mxu0 0.0
    %1425 = vmatmul.mubr.f32.gmra.mrb[0].mxu0 %v999
    %v1426 = vpop.f32.mrb[0].mxu0
    %v1427 = vadd.f32 0.0, %v1426
    %v1428 = vpop.f32.mrb[0].mxu0
    %1429 = vmatprep.mubr.f32.mxu0 0.0
    %1430 = vmatmul.mubr.f32.gmra.mrb[0].mxu0 %v1002
    %v1431 = vpop.f32.mrb[0].mxu0
    %v1432 = vadd.f32 0.0, %v1431
    %v1433 = vpop.f32.mrb[0].mxu0
    %1434 = vmatprep.mubr.f32.mxu0 0.0
    %1435 = vmatmul.mubr.f32.gmra.mrb[0].mxu0 %v1005
    %v1436 = vpop.f32.mrb[0].mxu0
    %v1437 = vadd.f32 0.0, %v1436
    %v1438 = vpop.f32.mrb[0].mxu0
    %1439 = vmatprep.mubr.f32.mxu0 0.0
    %1440 = vmatmul.mubr.f32.gmra.mrb[0].mxu0 %v1008
    %v1441 = vpop.f32.mrb[0].mxu0
    %v1442 = vadd.f32 0.0, %v1441
    %v1443 = vpop.f32.mrb[0].mxu0
    %1444 = vmatprep.mubr.f32.mxu0 0.0
    %1445 = vmatmul.mubr.f32.gmra.mrb[0].mxu0 %v1011
    %v1446 = vpop.f32.mrb[0].mxu0
    %v1447 = vadd.f32 0.0, %v1446
    %v1448 = vpop.f32.mrb[0].mxu0
    %1449 = vmatprep.mubr.f32.mxu0 0.0
    %1450 = vmatmul.mubr.f32.gmra.mrb[0].mxu0 %v1014
    %v1451 = vpop.f32.mrb[0].mxu0
    %v1452 = vadd.f32 0.0, %v1451
    %v1453 = vpop.f32.mrb[0].mxu0
    %1454 = vmatprep.mubr.f32.mxu0 0.0
    %1455 = vmatmul.mubr.f32.gmra.mrb[0].mxu0 %v1017
    %v1456 = vpop.f32.mrb[0].mxu0
    %v1457 = vadd.f32 0.0, %v1456
    %v1458 = vpop.f32.mrb[0].mxu0
    %1459 = vmatprep.mubr.f32.mxu0 0.0
    %1460 = vmatmul.mubr.f32.gmra.mrb[0].mxu0 %v1020
    %v1461 = vpop.f32.mrb[0].mxu0
    %v1462 = vadd.f32 0.0, %v1461
    %v1463 = vpop.f32.mrb[0].mxu0
    %1464 = vmatprep.mubr.f32.mxu0 0.0
    %1465 = vmatmul.mubr.f32.gmra.mrb[0].mxu0 %v1023
    %v1466 = vpop.f32.mrb[0].mxu0
    %v1467 = vadd.f32 0.0, %v1466
    %v1468 = vpop.f32.mrb[0].mxu0
    %1469 = vmatprep.mubr.f32.mxu0 0.0
    %1470 = vmatmul.mubr.f32.gmra.mrb[0].mxu0 %v1026
    %v1471 = vpop.f32.mrb[0].mxu0
    %v1472 = vadd.f32 0.0, %v1471
    %v1473 = vpop.f32.mrb[0].mxu0
    %1474 = vmatprep.mubr.f32.mxu0 0.0
    %1475 = vmatmul.mubr.f32.gmra.mrb[0].mxu0 %v1029
    %v1476 = vpop.f32.mrb[0].mxu0
    %v1477 = vadd.f32 0.0, %v1476
    %v1478 = vpop.f32.mrb[0].mxu0
    %1479 = vmatprep.mubr.f32.mxu0 0.0
    %1480 = vmatmul.mubr.f32.gmra.mrb[0].mxu0 %v1032
    %v1481 = vpop.f32.mrb[0].mxu0
    %v1482 = vadd.f32 0.0, %v1481
    %v1483 = vpop.f32.mrb[0].mxu0
    %1484 = vmatprep.mubr.f32.mxu0 0.0
    %1485 = vmatmul.mubr.f32.gmra.mrb[0].mxu0 %v1035
    %v1486 = vpop.f32.mrb[0].mxu0
    %v1487 = vadd.f32 0.0, %v1486
    %v1488 = vpop.f32.mrb[0].mxu0
    %1489 = vmatprep.mubr.f32.mxu0 0.0
    %1490 = vmatmul.mubr.f32.gmra.mrb[0].mxu0 %v1038
    %v1491 = vpop.f32.mrb[0].mxu0
    %v1492 = vadd.f32 0.0, %v1491
    %v1493 = vpop.f32.mrb[0].mxu0
    %1494 = vdwg.mxu0
    %1495 = vmatprep.subr.mxu0 0.0
    %1496 = vmatpush1.msra.mxu0 %v1107
    %1497 = vmatprep.subr.mxu0 0.0
    %1498 = vmatpush1.msra.mxu0 %v1112
    %1499 = vmatprep.subr.mxu0 0.0
    %1500 = vmatpush1.msra.mxu0 %v1117
    %1501 = vmatprep.subr.mxu0 0.0
    %1502 = vmatpush1.msra.mxu0 %v1122
    %1503 = vmatprep.subr.mxu0 0.0
    %1504 = vmatpush1.msra.mxu0 %v1127
    %1505 = vmatprep.subr.mxu0 0.0
    %1506 = vmatpush1.msra.mxu0 %v1132
    %1507 = vmatprep.subr.mxu0 0.0
    %1508 = vmatpush1.msra.mxu0 %v1137
    %1509 = vmatprep.subr.mxu0 0.0
    %1510 = vmatpush1.msra.mxu0 %v1142
    %1511 = vmatprep.subr.mxu0 0.0
    %1512 = vmatpush1.msra.mxu0 %v1147
    %1513 = vmatprep.subr.mxu0 0.0
    %1514 = vmatpush1.msra.mxu0 %v1152
    %1515 = vmatprep.subr.mxu0 0.0
    %1516 = vmatpush1.msra.mxu0 %v1157
    %1517 = vmatprep.subr.mxu0 0.0
    %1518 = vmatpush1.msra.mxu0 %v1162
    %1519 = vmatprep.subr.mxu0 0.0
    %1520 = vmatpush1.msra.mxu0 %v1167
    %1521 = vmatprep.subr.mxu0 0.0
    %1522 = vmatpush1.msra.mxu0 %v1172
    %1523 = vmatprep.subr.mxu0 0.0
    %1524 = vmatpush1.msra.mxu0 %v1177
    %1525 = vmatprep.subr.mxu0 0.0
    %1526 = vmatpush1.msra.mxu0 %v1182
    %1527 = vmatprep.subr.mxu0 0.0
    %1528 = vmatpush1.msra.mxu0 %v1187
    %1529 = vmatprep.subr.mxu0 0.0
    %1530 = vmatpush1.msra.mxu0 %v1192
    %1531 = vmatprep.subr.mxu0 0.0
    %1532 = vmatpush1.msra.mxu0 %v1197
    %1533 = vmatprep.subr.mxu0 0.0
    %1534 = vmatpush1.msra.mxu0 %v1202
    %1535 = vmatprep.subr.mxu0 0.0
    %1536 = vmatpush1.msra.mxu0 %v1207
    %1537 = vmatprep.subr.mxu0 0.0
    %1538 = vmatpush1.msra.mxu0 %v1212
    %1539 = vmatprep.subr.mxu0 0.0
    %1540 = vmatpush1.msra.mxu0 %v1217
    %1541 = vmatprep.subr.mxu0 0.0
    %1542 = vmatpush1.msra.mxu0 %v1222
    %1543 = vmatprep.subr.mxu0 0.0
    %1544 = vmatpush1.msra.mxu0 %v1227
    %1545 = vmatprep.subr.mxu0 0.0
    %1546 = vmatpush1.msra.mxu0 %v1232
    %1547 = vmatprep.subr.mxu0 0.0
    %1548 = vmatpush1.msra.mxu0 %v1237
    %1549 = vmatprep.subr.mxu0 0.0
    %1550 = vmatpush1.msra.mxu0 %v1242
    %1551 = vmatprep.subr.mxu0 0.0
    %1552 = vmatpush1.msra.mxu0 %v1247
    %1553 = vmatprep.subr.mxu0 0.0
    %1554 = vmatpush1.msra.mxu0 %v1252
    %1555 = vmatprep.subr.mxu0 0.0
    %1556 = vmatpush1.msra.mxu0 %v1257
    %1557 = vmatprep.subr.mxu0 0.0
    %1558 = vmatpush1.msra.mxu0 %v1262
    %1559 = vmatprep.mubr.f32.mxu0 %v32
    %1560 = vmatmul.mubr.f32.gmra.mrb[0].mxu0 %v31
    %v1561 = vpop.f32.mrb[0].mxu0
    %v1562 = vadd.f32 %v1337, %v1561
    %v1563 = vpop.f32.mrb[0].mxu0
    %1564 = vmatprep.mubr.f32.mxu0 %v34
    %1565 = vmatmul.mubr.f32.gmra.mrb[0].mxu0 %v33
    %v1566 = vpop.f32.mrb[0].mxu0
    %v1567 = vadd.f32 %v1342, %v1566
    %v1568 = vpop.f32.mrb[0].mxu0
    %1569 = vmatprep.mubr.f32.mxu0 %v36
    %1570 = vmatmul.mubr.f32.gmra.mrb[0].mxu0 %v35
    %v1571 = vpop.f32.mrb[0].mxu0
    %v1572 = vadd.f32 %v1347, %v1571
    %v1573 = vpop.f32.mrb[0].mxu0
    %1574 = vmatprep.mubr.f32.mxu0 %v38
    %1575 = vmatmul.mubr.f32.gmra.mrb[0].mxu0 %v37
    %v1576 = vpop.f32.mrb[0].mxu0
    %v1577 = vadd.f32 %v1352, %v1576
    %v1578 = vpop.f32.mrb[0].mxu0
    %1579 = vmatprep.mubr.f32.mxu0 %v40
    %1580 = vmatmul.mubr.f32.gmra.mrb[0].mxu0 %v39
    %v1581 = vpop.f32.mrb[0].mxu0
    %v1582 = vadd.f32 %v1357, %v1581
    %v1583 = vpop.f32.mrb[0].mxu0
    %1584 = vmatprep.mubr.f32.mxu0 %v42
    %1585 = vmatmul.mubr.f32.gmra.mrb[0].mxu0 %v41
    %v1586 = vpop.f32.mrb[0].mxu0
    %v1587 = vadd.f32 %v1362, %v1586
    %v1588 = vpop.f32.mrb[0].mxu0
    %1589 = vmatprep.mubr.f32.mxu0 %v44
    %1590 = vmatmul.mubr.f32.gmra.mrb[0].mxu0 %v43
    %v1591 = vpop.f32.mrb[0].mxu0
    %v1592 = vadd.f32 %v1367, %v1591
    %v1593 = vpop.f32.mrb[0].mxu0
    %1594 = vmatprep.mubr.f32.mxu0 %v46
    %1595 = vmatmul.mubr.f32.gmra.mrb[0].mxu0 %v45
    %v1596 = vpop.f32.mrb[0].mxu0
    %v1597 = vadd.f32 %v1372, %v1596
    %v1598 = vpop.f32.mrb[0].mxu0
    %1599 = vmatprep.mubr.f32.mxu0 %v48
    %1600 = vmatmul.mubr.f32.gmra.mrb[0].mxu0 %v47
    %v1601 = vpop.f32.mrb[0].mxu0
    %v1602 = vadd.f32 %v1377, %v1601
    %v1603 = vpop.f32.mrb[0].mxu0
    %1604 = vmatprep.mubr.f32.mxu0 %v50
    %1605 = vmatmul.mubr.f32.gmra.mrb[0].mxu0 %v49
    %v1606 = vpop.f32.mrb[0].mxu0
    %v1607 = vadd.f32 %v1382, %v1606
    %v1608 = vpop.f32.mrb[0].mxu0
    %1609 = vmatprep.mubr.f32.mxu0 %v52
    %1610 = vmatmul.mubr.f32.gmra.mrb[0].mxu0 %v51
    %v1611 = vpop.f32.mrb[0].mxu0
    %v1612 = vadd.f32 %v1387, %v1611
    %v1613 = vpop.f32.mrb[0].mxu0
    %1614 = vmatprep.mubr.f32.mxu0 %v54
    %1615 = vmatmul.mubr.f32.gmra.mrb[0].mxu0 %v53
    %v1616 = vpop.f32.mrb[0].mxu0
    %v1617 = vadd.f32 %v1392, %v1616
    %v1618 = vpop.f32.mrb[0].mxu0
    %1619 = vmatprep.mubr.f32.mxu0 %v56
    %1620 = vmatmul.mubr.f32.gmra.mrb[0].mxu0 %v55
    %v1621 = vpop.f32.mrb[0].mxu0
    %v1622 = vadd.f32 %v1397, %v1621
    %v1623 = vpop.f32.mrb[0].mxu0
    %1624 = vmatprep.mubr.f32.mxu0 %v58
    %1625 = vmatmul.mubr.f32.gmra.mrb[0].mxu0 %v57
    %v1626 = vpop.f32.mrb[0].mxu0
    %v1627 = vadd.f32 %v1402, %v1626
    %v1628 = vpop.f32.mrb[0].mxu0
    %1629 = vmatprep.mubr.f32.mxu0 %v60
    %1630 = vmatmul.mubr.f32.gmra.mrb[0].mxu0 %v59
    %v1631 = vpop.f32.mrb[0].mxu0
    %v1632 = vadd.f32 %v1407, %v1631
    %v1633 = vpop.f32.mrb[0].mxu0
    %1634 = vmatprep.mubr.f32.mxu0 %v62
    %1635 = vmatmul.mubr.f32.gmra.mrb[0].mxu0 %v61
    %v1636 = vpop.f32.mrb[0].mxu0
    %v1637 = vadd.f32 %v1412, %v1636
    %v1638 = vpop.f32.mrb[0].mxu0
    %1639 = vmatprep.mubr.f32.mxu0 %v64
    %1640 = vmatmul.mubr.f32.gmra.mrb[0].mxu0 %v63
    %v1641 = vpop.f32.mrb[0].mxu0
    %v1642 = vadd.f32 %v1417, %v1641
    %v1643 = vpop.f32.mrb[0].mxu0
    %1644 = vmatprep.mubr.f32.mxu0 %v66
    %1645 = vmatmul.mubr.f32.gmra.mrb[0].mxu0 %v65
    %v1646 = vpop.f32.mrb[0].mxu0
    %v1647 = vadd.f32 %v1422, %v1646
    %v1648 = vpop.f32.mrb[0].mxu0
    %1649 = vmatprep.mubr.f32.mxu0 %v68
    %1650 = vmatmul.mubr.f32.gmra.mrb[0].mxu0 %v67
    %v1651 = vpop.f32.mrb[0].mxu0
    %v1652 = vadd.f32 %v1427, %v1651
    %v1653 = vpop.f32.mrb[0].mxu0
    %1654 = vmatprep.mubr.f32.mxu0 %v70
    %1655 = vmatmul.mubr.f32.gmra.mrb[0].mxu0 %v69
    %v1656 = vpop.f32.mrb[0].mxu0
    %v1657 = vadd.f32 %v1432, %v1656
    %v1658 = vpop.f32.mrb[0].mxu0
    %1659 = vmatprep.mubr.f32.mxu0 %v72
    %1660 = vmatmul.mubr.f32.gmra.mrb[0].mxu0 %v71
    %v1661 = vpop.f32.mrb[0].mxu0
    %v1662 = vadd.f32 %v1437, %v1661
    %v1663 = vpop.f32.mrb[0].mxu0
    %1664 = vmatprep.mubr.f32.mxu0 %v74
    %1665 = vmatmul.mubr.f32.gmra.mrb[0].mxu0 %v73
    %v1666 = vpop.f32.mrb[0].mxu0
    %v1667 = vadd.f32 %v1442, %v1666
    %v1668 = vpop.f32.mrb[0].mxu0
    %1669 = vmatprep.mubr.f32.mxu0 %v76
    %1670 = vmatmul.mubr.f32.gmra.mrb[0].mxu0 %v75
    %v1671 = vpop.f32.mrb[0].mxu0
    %v1672 = vadd.f32 %v1447, %v1671
    %v1673 = vpop.f32.mrb[0].mxu0
    %1674 = vmatprep.mubr.f32.mxu0 %v78
    %1675 = vmatmul.mubr.f32.gmra.mrb[0].mxu0 %v77
    %v1676 = vpop.f32.mrb[0].mxu0
    %v1677 = vadd.f32 %v1452, %v1676
    %v1678 = vpop.f32.mrb[0].mxu0
    %1679 = vmatprep.mubr.f32.mxu0 %v80
    %1680 = vmatmul.mubr.f32.gmra.mrb[0].mxu0 %v79
    %v1681 = vpop.f32.mrb[0].mxu0
    %v1682 = vadd.f32 %v1457, %v1681
    %v1683 = vpop.f32.mrb[0].mxu0
    %1684 = vmatprep.mubr.f32.mxu0 %v82
    %1685 = vmatmul.mubr.f32.gmra.mrb[0].mxu0 %v81
    %v1686 = vpop.f32.mrb[0].mxu0
    %v1687 = vadd.f32 %v1462, %v1686
    %v1688 = vpop.f32.mrb[0].mxu0
    %1689 = vmatprep.mubr.f32.mxu0 %v84
    %1690 = vmatmul.mubr.f32.gmra.mrb[0].mxu0 %v83
    %v1691 = vpop.f32.mrb[0].mxu0
    %v1692 = vadd.f32 %v1467, %v1691
    %v1693 = vpop.f32.mrb[0].mxu0
    %1694 = vmatprep.mubr.f32.mxu0 %v86
    %1695 = vmatmul.mubr.f32.gmra.mrb[0].mxu0 %v85
    %v1696 = vpop.f32.mrb[0].mxu0
    %v1697 = vadd.f32 %v1472, %v1696
    %v1698 = vpop.f32.mrb[0].mxu0
    %1699 = vmatprep.mubr.f32.mxu0 %v88
    %1700 = vmatmul.mubr.f32.gmra.mrb[0].mxu0 %v87
    %v1701 = vpop.f32.mrb[0].mxu0
    %v1702 = vadd.f32 %v1477, %v1701
    %v1703 = vpop.f32.mrb[0].mxu0
    %1704 = vmatprep.mubr.f32.mxu0 %v90
    %1705 = vmatmul.mubr.f32.gmra.mrb[0].mxu0 %v89
    %v1706 = vpop.f32.mrb[0].mxu0
    %v1707 = vadd.f32 %v1482, %v1706
    %v1708 = vpop.f32.mrb[0].mxu0
    %1709 = vmatprep.mubr.f32.mxu0 %v92
    %1710 = vmatmul.mubr.f32.gmra.mrb[0].mxu0 %v91
    %v1711 = vpop.f32.mrb[0].mxu0
    %v1712 = vadd.f32 %v1487, %v1711
    %v1713 = vpop.f32.mrb[0].mxu0
    %1714 = vmatprep.mubr.f32.mxu0 %v94
    %1715 = vmatmul.mubr.f32.gmra.mrb[0].mxu0 %v93
    %v1716 = vpop.f32.mrb[0].mxu0
    %v1717 = vadd.f32 %v1492, %v1716
    %v1718 = vpop.f32.mrb[0].mxu0
    %1719 = vdwg.mxu0
    %v1720 = vtanh.pop %v1562
    %v1721 = vtanh.pop %v1567
    %v1722 = vtanh.pop %v1572
    %v1723 = vtanh.pop %v1577
    %v1724 = vtanh.pop %v1582
    %v1725 = vtanh.pop %v1587
    %v1726 = vtanh.pop %v1592
    %v1727 = vtanh.pop %v1597
    %v1728 = vtanh.pop %v1602
    %v1729 = vtanh.pop %v1607
    %v1730 = vtanh.pop %v1612
    %v1731 = vtanh.pop %v1617
    %v1732 = vtanh.pop %v1622
    %v1733 = vtanh.pop %v1627
    %v1734 = vtanh.pop %v1632
    %v1735 = vtanh.pop %v1637
    %v1736 = vtanh.pop %v1642
    %v1737 = vtanh.pop %v1647
    %v1738 = vtanh.pop %v1652
    %v1739 = vtanh.pop %v1657
    %v1740 = vtanh.pop %v1662
    %v1741 = vtanh.pop %v1667
    %v1742 = vtanh.pop %v1672
    %v1743 = vtanh.pop %v1677
    %v1744 = vtanh.pop %v1682
    %v1745 = vtanh.pop %v1687
    %v1746 = vtanh.pop %v1692
    %v1747 = vtanh.pop %v1697
    %v1748 = vtanh.pop %v1702
    %v1749 = vtanh.pop %v1707
    %v1750 = vtanh.pop %v1712
    %v1751 = vtanh.pop %v1717
    %1752 = vst.msk [vmem:[%s4] sm:$0xff] %vm131, %v1720
    %1753 = vst.msk [vmem:[%s4 + $0x8] sm:$0xff] %vm131, %v1721
    %1754 = vst.msk [vmem:[%s4 + $0x10] sm:$0xff] %vm131, %v1722
    %1755 = vst.msk [vmem:[%s4 + $0x18] sm:$0xff] %vm131, %v1723
    %1756 = vst.msk [vmem:[%s4 + $0x20] sm:$0xff] %vm131, %v1724
    %1757 = vst.msk [vmem:[%s4 + $0x28] sm:$0xff] %vm131, %v1725
    %1758 = vst.msk [vmem:[%s4 + $0x30] sm:$0xff] %vm131, %v1726
    %1759 = vst.msk [vmem:[%s4 + $0x38] sm:$0xff] %vm131, %v1727
    %1760 = vst.msk [vmem:[%s4 + $0x40] sm:$0xff] %vm131, %v1728
    %1761 = vst.msk [vmem:[%s4 + $0x48] sm:$0xff] %vm131, %v1729
    %1762 = vst.msk [vmem:[%s4 + $0x50] sm:$0xff] %vm131, %v1730
    %1763 = vst.msk [vmem:[%s4 + $0x58] sm:$0xff] %vm131, %v1731
    %1764 = vst.msk [vmem:[%s4 + $0x60] sm:$0xff] %vm131, %v1732
    %1765 = vst.msk [vmem:[%s4 + $0x68] sm:$0xff] %vm131, %v1733
    %1766 = vst.msk [vmem:[%s4 + $0x70] sm:$0xff] %vm131, %v1734
    %1767 = vst.msk [vmem:[%s4 + $0x78] sm:$0xff] %vm131, %v1735
    %1768 = vst.msk [vmem:[%s4 + $0x80] sm:$0xff] %vm131, %v1736
    %1769 = vst.msk [vmem:[%s4 + $0x88] sm:$0xff] %vm131, %v1737
    %1770 = vst.msk [vmem:[%s4 + $0x90] sm:$0xff] %vm131, %v1738
    %1771 = vst.msk [vmem:[%s4 + $0x98] sm:$0xff] %vm131, %v1739
    %1772 = vst.msk [vmem:[%s4 + $0xa0] sm:$0xff] %vm131, %v1740
    %1773 = vst.msk [vmem:[%s4 + $0xa8] sm:$0xff] %vm131, %v1741
    %1774 = vst.msk [vmem:[%s4 + $0xb0] sm:$0xff] %vm131, %v1742
    %1775 = vst.msk [vmem:[%s4 + $0xb8] sm:$0xff] %vm131, %v1743
    %1776 = vst.msk [vmem:[%s4 + $0xc0] sm:$0xff] %vm131, %v1744
    %1777 = vst.msk [vmem:[%s4 + $0xc8] sm:$0xff] %vm131, %v1745
    %1778 = vst.msk [vmem:[%s4 + $0xd0] sm:$0xff] %vm131, %v1746
    %1779 = vst.msk [vmem:[%s4 + $0xd8] sm:$0xff] %vm131, %v1747
    %1780 = vst.msk [vmem:[%s4 + $0xe0] sm:$0xff] %vm131, %v1748
    %1781 = vst.msk [vmem:[%s4 + $0xe8] sm:$0xff] %vm131, %v1749
    %1782 = vst.msk [vmem:[%s4 + $0xf0] sm:$0xff] %vm131, %v1750
    %1783 = vst.msk [vmem:[%s4 + $0xf8] sm:$0xff] %vm131, %v1751
    // Predicated region
    $region22: #{tpu_custom_call.1} parent=1 // pred_check
      _
    $region23: #{tpu_custom_call.1} parent=1 // pred_check_branch
      %1785 = sbr.rel (0) target = $region25
    $region24: #{tpu_custom_call.1} parent=1 // pred_region
      _
    $region25: #{tpu_custom_call.1} parent=1 // pred_fallthru
      _
    // Predicated region
    $region26: #{tpu_custom_call.1} parent=1 // pred_check
      _
    $region27: #{tpu_custom_call.1} parent=1 // pred_check_branch
      %1787 = sbr.rel (0) target = $region29
    $region28: #{tpu_custom_call.1} parent=1 // pred_region
      _
    $region29: #{tpu_custom_call.1} parent=1 // pred_fallthru
      _
    %1788 = vsyncpa [#allocation3], 1

</llo_original>
